<compile_context>
chip_gen: v6e
topology: v6e:2x2x1
jax: 0.10.0
libtpu: 0.0.40
codegen_flags: <defaults>
</compile_context>

<pallas_src>
import jax
import jax.numpy as jnp
from jax import lax
from jax.experimental import pallas as pl
from jax.experimental.pallas import tpu as pltpu


# ----------------------------------------------------------------------------- kernel
def seq2seq_kernel(x_ref, y_ref,
                   enc_wih_ref, enc_whh_ref, enc_b_ref,
                   dec_wih_ref, dec_whh_ref, dec_b_ref,
                   fc_w_ref, fc_b_ref,
                   out_ref, hs_ref):
    Tx, TB, Din = x_ref.shape          # encoder steps, batch tile, encoder input size
    Ty = y_ref.shape[0]                # decoder steps
    Dy = y_ref.shape[2]                # decoder input size (= output_size)
    H = enc_whh_ref.shape[0]           # hidden size
    G = enc_wih_ref.shape[1]           # 4 * H
    f32 = jnp.float32

    # ---- hoisted input projections: one big MXU matmul each, biases folded in.
    #      Time-major (T, TB, G) so each per-step slice is a leading-axis view.
    x_proj = (jnp.dot(x_ref[...].reshape(Tx * TB, Din), enc_wih_ref[...],
                      preferred_element_type=f32)
              + enc_b_ref[...]).reshape(Tx, TB, G)
    y_proj = (jnp.dot(y_ref[...].reshape(Ty * TB, Dy), dec_wih_ref[...],
                      preferred_element_type=f32)
              + dec_b_ref[...]).reshape(Ty, TB, G)

    enc_whh = enc_whh_ref[...]
    dec_whh = dec_whh_ref[...]

    def lstm_step(pre_gates, h, c, whh):
        # pre_gates = x_t @ Wih' + b' (precomputed, g columns pre-scaled by 2).
        gates = pre_gates + jnp.dot(h, whh, preferred_element_type=f32)
        s = jax.nn.sigmoid(gates)                 # ONE lane-dense EUP pass (TB, 4H)
        i = s[:, 0 * H:1 * H]
        f = s[:, 1 * H:2 * H]
        g = 2.0 * s[:, 2 * H:3 * H] - 1.0         # = tanh(pre_g)  (exact identity)
        o = s[:, 3 * H:4 * H]
        c_new = f * c + i * g
        h_new = o * jnp.tanh(c_new)
        return h_new, c_new

    h = jnp.zeros((TB, H), f32)
    c = jnp.zeros((TB, H), f32)

    # -------- encoder: fully unrolled, only final (h, c) is needed
    for t in range(Tx):
        h, c = lstm_step(x_proj[t], h, c, enc_whh)

    # -------- decoder: fully unrolled; hidden states into VMEM scratch (static offsets)
    for t in range(Ty):
        h, c = lstm_step(y_proj[t], h, c, dec_whh)
        hs_ref[t * TB:(t + 1) * TB, :] = h

    # -------- batched FC projection + single lane-dense store
    out = jnp.dot(hs_ref[...], fc_w_ref[...], preferred_element_type=f32) + fc_b_ref[...]
    out_ref[...] = out.reshape(Ty, TB, -1).astype(out_ref.dtype)


# ----------------------------------------------------------------------------- wrapper
def _round_up(a, m):
    return ((a + m - 1) // m) * m


@jax.jit
def seq2seq_forward(x, y, params):
    """x: (B, Tx, input_size), y: (B, Ty, output_size) -> (B, Ty, output_size)."""
    B, Tx, Din = x.shape
    _, Ty, Dout = y.shape
    H = params["enc_whh"].shape[1]
    G = 4 * H
    Dpad = _round_up(Dout, 128)                   # lane-dense FC output slab width

    # ---- batch-tile selection -------------------------------------------------
    def vmem_bytes(tb):
        f = 4
        blocks = 2 * (tb * Tx * Din + tb * Ty * Dout + Ty * tb * Dpad) * f   # dbl-buffered
        weights = 2 * ((Din + H) * G + (Dout + H) * G + 2 * G + H * Dpad + Dpad) * f
        live = (tb * (Tx + Ty) * G + Ty * tb * H + 4 * tb * G) * f           # proj/scratch/temps
        return blocks + weights + live

    Bp8 = _round_up(B, 8)
    TB = min(128, Bp8)                            # fill MXU rows at realistic batch
    if Bp8 >= 16:                                 # >= 2 grid tiles -> shards across v7x TCs
        TB = min(TB, max(8, _round_up(Bp8 // 2, 8)))
    VMEM_BUDGET = 48 * 1024 * 1024                # headroom vs v7x's 64 MiB/TC
    while TB > 8 and vmem_bytes(TB) > VMEM_BUDGET:
        TB -= 8
    Bp = _round_up(B, TB)
    vmem_limit = int(min(64 * 1024 * 1024,
                         max(32 * 1024 * 1024, 2 * vmem_bytes(TB))))

    # ---- time-major inputs, batch padded (padded rows are independent, sliced off)
    xt = jnp.pad(jnp.transpose(x, (1, 0, 2)), ((0, 0), (0, Bp - B), (0, 0)))   # (Tx, Bp, Din)
    yt = jnp.pad(jnp.transpose(y, (1, 0, 2)), ((0, 0), (0, Bp - B), (0, 0)))   # (Ty, Bp, Dout)

    # ---- weight prep: transpose, fuse biases, fold factor 2 into the g-gate columns
    def scale_g(a):                               # last axis is 4H; g block = [2H:3H)
        return a.at[..., 2 * H:3 * H].multiply(2.0)

    enc_wih_t = scale_g(params["enc_wih"].T)                                   # (Din, 4H)
    enc_whh_t = scale_g(params["enc_whh"].T)                                   # (H,   4H)
    enc_b = scale_g((params["enc_bih"] + params["enc_bhh"]).reshape(1, G))     # (1,   4H)
    dec_wih_t = scale_g(params["dec_wih"].T)                                   # (Dout,4H)
    dec_whh_t = scale_g(params["dec_whh"].T)                                   # (H,   4H)
    dec_b = scale_g((params["dec_bih"] + params["dec_bhh"]).reshape(1, G))     # (1,   4H)
    fc_w_p = jnp.pad(params["fc_w"].T, ((0, 0), (0, Dpad - Dout)))             # (H, Dpad)
    fc_b_p = jnp.pad(params["fc_b"], (0, Dpad - Dout)).reshape(1, Dpad)

    grid = (Bp // TB,)                            # batch grid axis (parallel across TCs)

    in_specs = [
        pl.BlockSpec((Tx, TB, Din), lambda b: (0, b, 0)),     # x  (time-major, batch tiled)
        pl.BlockSpec((Ty, TB, Dout), lambda b: (0, b, 0)),    # y  (time-major, batch tiled)
        pl.BlockSpec((Din, G), lambda b: (0, 0)),             # enc Wih^T (g cols *2)
        pl.BlockSpec((H, G), lambda b: (0, 0)),               # enc Whh^T (g cols *2)
        pl.BlockSpec((1, G), lambda b: (0, 0)),               # enc bias  (g cols *2)
        pl.BlockSpec((Dout, G), lambda b: (0, 0)),            # dec Wih^T (g cols *2)
        pl.BlockSpec((H, G), lambda b: (0, 0)),               # dec Whh^T (g cols *2)
        pl.BlockSpec((1, G), lambda b: (0, 0)),               # dec bias  (g cols *2)
        pl.BlockSpec((H, Dpad), lambda b: (0, 0)),            # fc W^T (lane-padded)
        pl.BlockSpec((1, Dpad), lambda b: (0, 0)),            # fc bias (lane-padded)
    ]
    out_specs = pl.BlockSpec((Ty, TB, Dpad), lambda b: (0, b, 0))

    out_tm = pl.pallas_call(
        seq2seq_kernel,
        out_shape=jax.ShapeDtypeStruct((Ty, Bp, Dpad), x.dtype),
        grid=grid,
        in_specs=in_specs,
        out_specs=out_specs,
        scratch_shapes=[pltpu.VMEM((Ty * TB, H), jnp.float32)],   # decoder hidden states
        compiler_params=pltpu.CompilerParams(
            dimension_semantics=("parallel",),
            vmem_limit_bytes=vmem_limit),
    )(xt, yt,
      enc_wih_t, enc_whh_t, enc_b,
      dec_wih_t, dec_whh_t, dec_b,
      fc_w_p, fc_b_p)

    # layout plumbing on the tiny lane-dense slab: (Ty, Bp, Dpad) -> (B, Ty, Dout)
    return jnp.transpose(out_tm, (1, 0, 2))[:B, :, :Dout]


# ----------------------------------------------------------------------------- pure-JAX reference
def seq2seq_reference(x, y, params):
    def lstm(seq, h, c, wih, whh, bih, bhh):
        H = whh.shape[1]

        def step(carry, x_t):
            h, c = carry
            gates = x_t @ wih.T + bih + h @ whh.T + bhh
            i = jax.nn.sigmoid(gates[:, 0 * H:1 * H])
            f = jax.nn.sigmoid(gates[:, 1 * H:2 * H])
            g = jnp.tanh(gates[:, 2 * H:3 * H])
            o = jax.nn.sigmoid(gates[:, 3 * H:4 * H])
            c = f * c + i * g
            h = o * jnp.tanh(c)
            return (h, c), h

        (h, c), hs = lax.scan(step, (h, c), jnp.transpose(seq, (1, 0, 2)))
        return jnp.transpose(hs, (1, 0, 2)), h, c

    B = x.shape[0]
    H = params["enc_whh"].shape[1]
    h0 = jnp.zeros((B, H), jnp.float32)
    c0 = jnp.zeros((B, H), jnp.float32)
    _, h, c = lstm(x, h0, c0, params["enc_wih"], params["enc_whh"],
                   params["enc_bih"], params["enc_bhh"])
    dec_out, _, _ = lstm(y, h, c, params["dec_wih"], params["dec_whh"],
                         params["dec_bih"], params["dec_bhh"])
    return dec_out @ params["fc_w"].T + params["fc_b"]


# ----------------------------------------------------------------------------- main
if __name__ == "__main__":
    input_size = 16
    hidden_size = 32
    output_size = 16
    B, Tx, Ty = 2, 8, 8

    key = jax.random.PRNGKey(0)
    ks = jax.random.split(key, 12)
    k = 1.0 / jnp.sqrt(hidden_size)

    def u(kk, shape):
        return jax.random.uniform(kk, shape, jnp.float32, -k, k)

    # Deterministic synthetic parameters (PyTorch nn.LSTM / nn.Linear shapes).
    params = {
        "enc_wih": u(ks[0], (4 * hidden_size, input_size)),
        "enc_whh": u(ks[1], (4 * hidden_size, hidden_size)),
        "enc_bih": u(ks[2], (4 * hidden_size,)),
        "enc_bhh": u(ks[3], (4 * hidden_size,)),
        "dec_wih": u(ks[4], (4 * hidden_size, output_size)),
        "dec_whh": u(ks[5], (4 * hidden_size, hidden_size)),
        "dec_bih": u(ks[6], (4 * hidden_size,)),
        "dec_bhh": u(ks[7], (4 * hidden_size,)),
        "fc_w":    u(ks[8], (output_size, hidden_size)),
        "fc_b":    u(ks[9], (output_size,)),
    }

    x = jax.random.normal(ks[10], (B, Tx, input_size), jnp.float32)
    y = jax.random.normal(ks[11], (B, Ty, output_size), jnp.float32)

    out = seq2seq_forward(x, y, params)
    out = jax.block_until_ready(out)

    ref = seq2seq_reference(x, y, params)
    assert out.shape == (B, Ty, output_size)
    assert jnp.allclose(out, ref, atol=1e-4, rtol=1e-4), float(jnp.max(jnp.abs(out - ref)))

    print("KERNEL_OK")
</pallas_src>

<mosaic_0001>
module attributes {stable_mosaic.version = 11 : i64} {
  func.func @seq2seq_kernel(%arg0: i32, %arg1: memref<8x8x16xf32, #tpu.memory_space<vmem>>, %arg2: memref<8x8x16xf32, #tpu.memory_space<vmem>>, %arg3: memref<16x128xf32, #tpu.memory_space<vmem>>, %arg4: memref<32x128xf32, #tpu.memory_space<vmem>>, %arg5: memref<1x128xf32, #tpu.memory_space<vmem>>, %arg6: memref<16x128xf32, #tpu.memory_space<vmem>>, %arg7: memref<32x128xf32, #tpu.memory_space<vmem>>, %arg8: memref<1x128xf32, #tpu.memory_space<vmem>>, %arg9: memref<32x128xf32, #tpu.memory_space<vmem>>, %arg10: memref<1x128xf32, #tpu.memory_space<vmem>>, %arg11: memref<8x8x128xf32, #tpu.memory_space<vmem>>, %arg12: memref<64x32xf32, #tpu.memory_space<vmem>>) attributes {dimension_semantics = [#tpu.dimension_semantics<parallel>], iteration_bounds = array<i64: 1>, scalar_prefetch = 0 : i64, scratch_operands = 1 : i64, tpu.core_type = #tpu.core_type<tc>, window_params = [{transform_indices = @transform_0, window_bounds = array<i64: 8, 8, 16>}, {transform_indices = @transform_1, window_bounds = array<i64: 8, 8, 16>}, {pipeline_mode = #tpu.pipeline_mode<synchronous>, transform_indices = @transform_2, window_bounds = array<i64: 16, 128>}, {pipeline_mode = #tpu.pipeline_mode<synchronous>, transform_indices = @transform_3, window_bounds = array<i64: 32, 128>}, {pipeline_mode = #tpu.pipeline_mode<synchronous>, transform_indices = @transform_4, window_bounds = array<i64: 1, 128>}, {pipeline_mode = #tpu.pipeline_mode<synchronous>, transform_indices = @transform_5, window_bounds = array<i64: 16, 128>}, {pipeline_mode = #tpu.pipeline_mode<synchronous>, transform_indices = @transform_6, window_bounds = array<i64: 32, 128>}, {pipeline_mode = #tpu.pipeline_mode<synchronous>, transform_indices = @transform_7, window_bounds = array<i64: 1, 128>}, {pipeline_mode = #tpu.pipeline_mode<synchronous>, transform_indices = @transform_8, window_bounds = array<i64: 32, 128>}, {pipeline_mode = #tpu.pipeline_mode<synchronous>, transform_indices = @transform_9, window_bounds = array<i64: 1, 128>}, {transform_indices = @transform_10, window_bounds = array<i64: 8, 8, 128>}]} {
    %c0 = arith.constant 0 : index
    %c0_0 = arith.constant 0 : index
    %c0_1 = arith.constant 0 : index
    %0 = vector.load %arg1[%c0, %c0_0, %c0_1] : memref<8x8x16xf32, #tpu.memory_space<vmem>>, vector<8x8x16xf32>
    %1 = vector.shape_cast %0 : vector<8x8x16xf32> to vector<64x16xf32>
    %c0_2 = arith.constant 0 : index
    %c0_3 = arith.constant 0 : index
    %2 = vector.load %arg3[%c0_2, %c0_3] : memref<16x128xf32, #tpu.memory_space<vmem>>, vector<16x128xf32>
    %cst = arith.constant dense<0.000000e+00> : vector<64x128xf32>
    %3 = tpu.matmul %1, %2, %cst {dimension_numbers = #tpu.dot_dimension_numbers<[1], [0], [0], [1], [0, 0, 1, 1], [], []>} : vector<64x16xf32>, vector<16x128xf32>, vector<64x128xf32> -> vector<64x128xf32>
    %c0_4 = arith.constant 0 : index
    %c0_5 = arith.constant 0 : index
    %4 = vector.load %arg5[%c0_4, %c0_5] : memref<1x128xf32, #tpu.memory_space<vmem>>, vector<1x128xf32>
    %5 = vector.broadcast %4 : vector<1x128xf32> to vector<64x128xf32>
    %6 = arith.addf %3, %5 : vector<64x128xf32>
    %7 = vector.shape_cast %6 : vector<64x128xf32> to vector<8x8x128xf32>
    %c0_6 = arith.constant 0 : index
    %c0_7 = arith.constant 0 : index
    %c0_8 = arith.constant 0 : index
    %8 = vector.load %arg2[%c0_6, %c0_7, %c0_8] : memref<8x8x16xf32, #tpu.memory_space<vmem>>, vector<8x8x16xf32>
    %9 = vector.shape_cast %8 : vector<8x8x16xf32> to vector<64x16xf32>
    %c0_9 = arith.constant 0 : index
    %c0_10 = arith.constant 0 : index
    %10 = vector.load %arg6[%c0_9, %c0_10] : memref<16x128xf32, #tpu.memory_space<vmem>>, vector<16x128xf32>
    %cst_11 = arith.constant dense<0.000000e+00> : vector<64x128xf32>
    %11 = tpu.matmul %9, %10, %cst_11 {dimension_numbers = #tpu.dot_dimension_numbers<[1], [0], [0], [1], [0, 0, 1, 1], [], []>} : vector<64x16xf32>, vector<16x128xf32>, vector<64x128xf32> -> vector<64x128xf32>
    %c0_12 = arith.constant 0 : index
    %c0_13 = arith.constant 0 : index
    %12 = vector.load %arg8[%c0_12, %c0_13] : memref<1x128xf32, #tpu.memory_space<vmem>>, vector<1x128xf32>
    %13 = vector.broadcast %12 : vector<1x128xf32> to vector<64x128xf32>
    %14 = arith.addf %11, %13 : vector<64x128xf32>
    %15 = vector.shape_cast %14 : vector<64x128xf32> to vector<8x8x128xf32>
    %c0_14 = arith.constant 0 : index
    %c0_15 = arith.constant 0 : index
    %16 = vector.load %arg4[%c0_14, %c0_15] : memref<32x128xf32, #tpu.memory_space<vmem>>, vector<32x128xf32>
    %c0_16 = arith.constant 0 : index
    %c0_17 = arith.constant 0 : index
    %17 = vector.load %arg7[%c0_16, %c0_17] : memref<32x128xf32, #tpu.memory_space<vmem>>, vector<32x128xf32>
    %cst_18 = arith.constant 0.000000e+00 : f32
    %18 = vector.broadcast %cst_18 : f32 to vector<8x32xf32>
    %cst_19 = arith.constant 0.000000e+00 : f32
    %19 = vector.broadcast %cst_19 : f32 to vector<8x32xf32>
    %20 = vector.extract_strided_slice %7 {offsets = [0, 0, 0], sizes = [1, 8, 128], strides = [1, 1, 1]} : vector<8x8x128xf32> to vector<1x8x128xf32>
    %21 = vector.shape_cast %20 : vector<1x8x128xf32> to vector<8x128xf32>
    %cst_20 = arith.constant dense<0.000000e+00> : vector<8x128xf32>
    %22 = tpu.matmul %18, %16, %cst_20 {dimension_numbers = #tpu.dot_dimension_numbers<[1], [0], [0], [1], [0, 0, 1, 1], [], []>} : vector<8x32xf32>, vector<32x128xf32>, vector<8x128xf32> -> vector<8x128xf32>
    %23 = arith.addf %21, %22 : vector<8x128xf32>
    %24 = arith.negf %23 : vector<8x128xf32>
    %25 = math.exp %24 : vector<8x128xf32>
    %cst_21 = arith.constant 1.000000e+00 : f32
    %26 = vector.broadcast %cst_21 : f32 to vector<8x128xf32>
    %27 = arith.addf %26, %25 : vector<8x128xf32>
    %28 = arith.divf %26, %27 : vector<8x128xf32>
    %29 = vector.extract_strided_slice %28 {offsets = [0, 0], sizes = [8, 32], strides = [1, 1]} : vector<8x128xf32> to vector<8x32xf32>
    %30 = vector.extract_strided_slice %28 {offsets = [0, 32], sizes = [8, 32], strides = [1, 1]} : vector<8x128xf32> to vector<8x32xf32>
    %31 = vector.extract_strided_slice %28 {offsets = [0, 64], sizes = [8, 32], strides = [1, 1]} : vector<8x128xf32> to vector<8x32xf32>
    %cst_22 = arith.constant 2.000000e+00 : f32
    %32 = vector.broadcast %cst_22 : f32 to vector<8x32xf32>
    %33 = arith.mulf %32, %31 : vector<8x32xf32>
    %cst_23 = arith.constant 1.000000e+00 : f32
    %34 = vector.broadcast %cst_23 : f32 to vector<8x32xf32>
    %35 = arith.subf %33, %34 : vector<8x32xf32>
    %36 = vector.extract_strided_slice %28 {offsets = [0, 96], sizes = [8, 32], strides = [1, 1]} : vector<8x128xf32> to vector<8x32xf32>
    %37 = arith.mulf %30, %19 : vector<8x32xf32>
    %38 = arith.mulf %29, %35 : vector<8x32xf32>
    %39 = arith.addf %37, %38 : vector<8x32xf32>
    %40 = math.tanh %39 : vector<8x32xf32>
    %41 = arith.mulf %36, %40 : vector<8x32xf32>
    %42 = vector.extract_strided_slice %7 {offsets = [1, 0, 0], sizes = [1, 8, 128], strides = [1, 1, 1]} : vector<8x8x128xf32> to vector<1x8x128xf32>
    %43 = vector.shape_cast %42 : vector<1x8x128xf32> to vector<8x128xf32>
    %cst_24 = arith.constant dense<0.000000e+00> : vector<8x128xf32>
    %44 = tpu.matmul %41, %16, %cst_24 {dimension_numbers = #tpu.dot_dimension_numbers<[1], [0], [0], [1], [0, 0, 1, 1], [], []>} : vector<8x32xf32>, vector<32x128xf32>, vector<8x128xf32> -> vector<8x128xf32>
    %45 = arith.addf %43, %44 : vector<8x128xf32>
    %46 = arith.negf %45 : vector<8x128xf32>
    %47 = math.exp %46 : vector<8x128xf32>
    %cst_25 = arith.constant 1.000000e+00 : f32
    %48 = vector.broadcast %cst_25 : f32 to vector<8x128xf32>
    %49 = arith.addf %48, %47 : vector<8x128xf32>
    %50 = arith.divf %48, %49 : vector<8x128xf32>
    %51 = vector.extract_strided_slice %50 {offsets = [0, 0], sizes = [8, 32], strides = [1, 1]} : vector<8x128xf32> to vector<8x32xf32>
    %52 = vector.extract_strided_slice %50 {offsets = [0, 32], sizes = [8, 32], strides = [1, 1]} : vector<8x128xf32> to vector<8x32xf32>
    %53 = vector.extract_strided_slice %50 {offsets = [0, 64], sizes = [8, 32], strides = [1, 1]} : vector<8x128xf32> to vector<8x32xf32>
    %cst_26 = arith.constant 2.000000e+00 : f32
    %54 = vector.broadcast %cst_26 : f32 to vector<8x32xf32>
    %55 = arith.mulf %54, %53 : vector<8x32xf32>
    %cst_27 = arith.constant 1.000000e+00 : f32
    %56 = vector.broadcast %cst_27 : f32 to vector<8x32xf32>
    %57 = arith.subf %55, %56 : vector<8x32xf32>
    %58 = vector.extract_strided_slice %50 {offsets = [0, 96], sizes = [8, 32], strides = [1, 1]} : vector<8x128xf32> to vector<8x32xf32>
    %59 = arith.mulf %52, %39 : vector<8x32xf32>
    %60 = arith.mulf %51, %57 : vector<8x32xf32>
    %61 = arith.addf %59, %60 : vector<8x32xf32>
    %62 = math.tanh %61 : vector<8x32xf32>
    %63 = arith.mulf %58, %62 : vector<8x32xf32>
    %64 = vector.extract_strided_slice %7 {offsets = [2, 0, 0], sizes = [1, 8, 128], strides = [1, 1, 1]} : vector<8x8x128xf32> to vector<1x8x128xf32>
    %65 = vector.shape_cast %64 : vector<1x8x128xf32> to vector<8x128xf32>
    %cst_28 = arith.constant dense<0.000000e+00> : vector<8x128xf32>
    %66 = tpu.matmul %63, %16, %cst_28 {dimension_numbers = #tpu.dot_dimension_numbers<[1], [0], [0], [1], [0, 0, 1, 1], [], []>} : vector<8x32xf32>, vector<32x128xf32>, vector<8x128xf32> -> vector<8x128xf32>
    %67 = arith.addf %65, %66 : vector<8x128xf32>
    %68 = arith.negf %67 : vector<8x128xf32>
    %69 = math.exp %68 : vector<8x128xf32>
    %cst_29 = arith.constant 1.000000e+00 : f32
    %70 = vector.broadcast %cst_29 : f32 to vector<8x128xf32>
    %71 = arith.addf %70, %69 : vector<8x128xf32>
    %72 = arith.divf %70, %71 : vector<8x128xf32>
    %73 = vector.extract_strided_slice %72 {offsets = [0, 0], sizes = [8, 32], strides = [1, 1]} : vector<8x128xf32> to vector<8x32xf32>
    %74 = vector.extract_strided_slice %72 {offsets = [0, 32], sizes = [8, 32], strides = [1, 1]} : vector<8x128xf32> to vector<8x32xf32>
    %75 = vector.extract_strided_slice %72 {offsets = [0, 64], sizes = [8, 32], strides = [1, 1]} : vector<8x128xf32> to vector<8x32xf32>
    %cst_30 = arith.constant 2.000000e+00 : f32
    %76 = vector.broadcast %cst_30 : f32 to vector<8x32xf32>
    %77 = arith.mulf %76, %75 : vector<8x32xf32>
    %cst_31 = arith.constant 1.000000e+00 : f32
    %78 = vector.broadcast %cst_31 : f32 to vector<8x32xf32>
    %79 = arith.subf %77, %78 : vector<8x32xf32>
    %80 = vector.extract_strided_slice %72 {offsets = [0, 96], sizes = [8, 32], strides = [1, 1]} : vector<8x128xf32> to vector<8x32xf32>
    %81 = arith.mulf %74, %61 : vector<8x32xf32>
    %82 = arith.mulf %73, %79 : vector<8x32xf32>
    %83 = arith.addf %81, %82 : vector<8x32xf32>
    %84 = math.tanh %83 : vector<8x32xf32>
    %85 = arith.mulf %80, %84 : vector<8x32xf32>
    %86 = vector.extract_strided_slice %7 {offsets = [3, 0, 0], sizes = [1, 8, 128], strides = [1, 1, 1]} : vector<8x8x128xf32> to vector<1x8x128xf32>
    %87 = vector.shape_cast %86 : vector<1x8x128xf32> to vector<8x128xf32>
    %cst_32 = arith.constant dense<0.000000e+00> : vector<8x128xf32>
    %88 = tpu.matmul %85, %16, %cst_32 {dimension_numbers = #tpu.dot_dimension_numbers<[1], [0], [0], [1], [0, 0, 1, 1], [], []>} : vector<8x32xf32>, vector<32x128xf32>, vector<8x128xf32> -> vector<8x128xf32>
    %89 = arith.addf %87, %88 : vector<8x128xf32>
    %90 = arith.negf %89 : vector<8x128xf32>
    %91 = math.exp %90 : vector<8x128xf32>
    %cst_33 = arith.constant 1.000000e+00 : f32
    %92 = vector.broadcast %cst_33 : f32 to vector<8x128xf32>
    %93 = arith.addf %92, %91 : vector<8x128xf32>
    %94 = arith.divf %92, %93 : vector<8x128xf32>
    %95 = vector.extract_strided_slice %94 {offsets = [0, 0], sizes = [8, 32], strides = [1, 1]} : vector<8x128xf32> to vector<8x32xf32>
    %96 = vector.extract_strided_slice %94 {offsets = [0, 32], sizes = [8, 32], strides = [1, 1]} : vector<8x128xf32> to vector<8x32xf32>
    %97 = vector.extract_strided_slice %94 {offsets = [0, 64], sizes = [8, 32], strides = [1, 1]} : vector<8x128xf32> to vector<8x32xf32>
    %cst_34 = arith.constant 2.000000e+00 : f32
    %98 = vector.broadcast %cst_34 : f32 to vector<8x32xf32>
    %99 = arith.mulf %98, %97 : vector<8x32xf32>
    %cst_35 = arith.constant 1.000000e+00 : f32
    %100 = vector.broadcast %cst_35 : f32 to vector<8x32xf32>
    %101 = arith.subf %99, %100 : vector<8x32xf32>
    %102 = vector.extract_strided_slice %94 {offsets = [0, 96], sizes = [8, 32], strides = [1, 1]} : vector<8x128xf32> to vector<8x32xf32>
    %103 = arith.mulf %96, %83 : vector<8x32xf32>
    %104 = arith.mulf %95, %101 : vector<8x32xf32>
    %105 = arith.addf %103, %104 : vector<8x32xf32>
    %106 = math.tanh %105 : vector<8x32xf32>
    %107 = arith.mulf %102, %106 : vector<8x32xf32>
    %108 = vector.extract_strided_slice %7 {offsets = [4, 0, 0], sizes = [1, 8, 128], strides = [1, 1, 1]} : vector<8x8x128xf32> to vector<1x8x128xf32>
    %109 = vector.shape_cast %108 : vector<1x8x128xf32> to vector<8x128xf32>
    %cst_36 = arith.constant dense<0.000000e+00> : vector<8x128xf32>
    %110 = tpu.matmul %107, %16, %cst_36 {dimension_numbers = #tpu.dot_dimension_numbers<[1], [0], [0], [1], [0, 0, 1, 1], [], []>} : vector<8x32xf32>, vector<32x128xf32>, vector<8x128xf32> -> vector<8x128xf32>
    %111 = arith.addf %109, %110 : vector<8x128xf32>
    %112 = arith.negf %111 : vector<8x128xf32>
    %113 = math.exp %112 : vector<8x128xf32>
    %cst_37 = arith.constant 1.000000e+00 : f32
    %114 = vector.broadcast %cst_37 : f32 to vector<8x128xf32>
    %115 = arith.addf %114, %113 : vector<8x128xf32>
    %116 = arith.divf %114, %115 : vector<8x128xf32>
    %117 = vector.extract_strided_slice %116 {offsets = [0, 0], sizes = [8, 32], strides = [1, 1]} : vector<8x128xf32> to vector<8x32xf32>
    %118 = vector.extract_strided_slice %116 {offsets = [0, 32], sizes = [8, 32], strides = [1, 1]} : vector<8x128xf32> to vector<8x32xf32>
    %119 = vector.extract_strided_slice %116 {offsets = [0, 64], sizes = [8, 32], strides = [1, 1]} : vector<8x128xf32> to vector<8x32xf32>
    %cst_38 = arith.constant 2.000000e+00 : f32
    %120 = vector.broadcast %cst_38 : f32 to vector<8x32xf32>
    %121 = arith.mulf %120, %119 : vector<8x32xf32>
    %cst_39 = arith.constant 1.000000e+00 : f32
    %122 = vector.broadcast %cst_39 : f32 to vector<8x32xf32>
    %123 = arith.subf %121, %122 : vector<8x32xf32>
    %124 = vector.extract_strided_slice %116 {offsets = [0, 96], sizes = [8, 32], strides = [1, 1]} : vector<8x128xf32> to vector<8x32xf32>
    %125 = arith.mulf %118, %105 : vector<8x32xf32>
    %126 = arith.mulf %117, %123 : vector<8x32xf32>
    %127 = arith.addf %125, %126 : vector<8x32xf32>
    %128 = math.tanh %127 : vector<8x32xf32>
    %129 = arith.mulf %124, %128 : vector<8x32xf32>
    %130 = vector.extract_strided_slice %7 {offsets = [5, 0, 0], sizes = [1, 8, 128], strides = [1, 1, 1]} : vector<8x8x128xf32> to vector<1x8x128xf32>
    %131 = vector.shape_cast %130 : vector<1x8x128xf32> to vector<8x128xf32>
    %cst_40 = arith.constant dense<0.000000e+00> : vector<8x128xf32>
    %132 = tpu.matmul %129, %16, %cst_40 {dimension_numbers = #tpu.dot_dimension_numbers<[1], [0], [0], [1], [0, 0, 1, 1], [], []>} : vector<8x32xf32>, vector<32x128xf32>, vector<8x128xf32> -> vector<8x128xf32>
    %133 = arith.addf %131, %132 : vector<8x128xf32>
    %134 = arith.negf %133 : vector<8x128xf32>
    %135 = math.exp %134 : vector<8x128xf32>
    %cst_41 = arith.constant 1.000000e+00 : f32
    %136 = vector.broadcast %cst_41 : f32 to vector<8x128xf32>
    %137 = arith.addf %136, %135 : vector<8x128xf32>
    %138 = arith.divf %136, %137 : vector<8x128xf32>
    %139 = vector.extract_strided_slice %138 {offsets = [0, 0], sizes = [8, 32], strides = [1, 1]} : vector<8x128xf32> to vector<8x32xf32>
    %140 = vector.extract_strided_slice %138 {offsets = [0, 32], sizes = [8, 32], strides = [1, 1]} : vector<8x128xf32> to vector<8x32xf32>
    %141 = vector.extract_strided_slice %138 {offsets = [0, 64], sizes = [8, 32], strides = [1, 1]} : vector<8x128xf32> to vector<8x32xf32>
    %cst_42 = arith.constant 2.000000e+00 : f32
    %142 = vector.broadcast %cst_42 : f32 to vector<8x32xf32>
    %143 = arith.mulf %142, %141 : vector<8x32xf32>
    %cst_43 = arith.constant 1.000000e+00 : f32
    %144 = vector.broadcast %cst_43 : f32 to vector<8x32xf32>
    %145 = arith.subf %143, %144 : vector<8x32xf32>
    %146 = vector.extract_strided_slice %138 {offsets = [0, 96], sizes = [8, 32], strides = [1, 1]} : vector<8x128xf32> to vector<8x32xf32>
    %147 = arith.mulf %140, %127 : vector<8x32xf32>
    %148 = arith.mulf %139, %145 : vector<8x32xf32>
    %149 = arith.addf %147, %148 : vector<8x32xf32>
    %150 = math.tanh %149 : vector<8x32xf32>
    %151 = arith.mulf %146, %150 : vector<8x32xf32>
    %152 = vector.extract_strided_slice %7 {offsets = [6, 0, 0], sizes = [1, 8, 128], strides = [1, 1, 1]} : vector<8x8x128xf32> to vector<1x8x128xf32>
    %153 = vector.shape_cast %152 : vector<1x8x128xf32> to vector<8x128xf32>
    %cst_44 = arith.constant dense<0.000000e+00> : vector<8x128xf32>
    %154 = tpu.matmul %151, %16, %cst_44 {dimension_numbers = #tpu.dot_dimension_numbers<[1], [0], [0], [1], [0, 0, 1, 1], [], []>} : vector<8x32xf32>, vector<32x128xf32>, vector<8x128xf32> -> vector<8x128xf32>
    %155 = arith.addf %153, %154 : vector<8x128xf32>
    %156 = arith.negf %155 : vector<8x128xf32>
    %157 = math.exp %156 : vector<8x128xf32>
    %cst_45 = arith.constant 1.000000e+00 : f32
    %158 = vector.broadcast %cst_45 : f32 to vector<8x128xf32>
    %159 = arith.addf %158, %157 : vector<8x128xf32>
    %160 = arith.divf %158, %159 : vector<8x128xf32>
    %161 = vector.extract_strided_slice %160 {offsets = [0, 0], sizes = [8, 32], strides = [1, 1]} : vector<8x128xf32> to vector<8x32xf32>
    %162 = vector.extract_strided_slice %160 {offsets = [0, 32], sizes = [8, 32], strides = [1, 1]} : vector<8x128xf32> to vector<8x32xf32>
    %163 = vector.extract_strided_slice %160 {offsets = [0, 64], sizes = [8, 32], strides = [1, 1]} : vector<8x128xf32> to vector<8x32xf32>
    %cst_46 = arith.constant 2.000000e+00 : f32
    %164 = vector.broadcast %cst_46 : f32 to vector<8x32xf32>
    %165 = arith.mulf %164, %163 : vector<8x32xf32>
    %cst_47 = arith.constant 1.000000e+00 : f32
    %166 = vector.broadcast %cst_47 : f32 to vector<8x32xf32>
    %167 = arith.subf %165, %166 : vector<8x32xf32>
    %168 = vector.extract_strided_slice %160 {offsets = [0, 96], sizes = [8, 32], strides = [1, 1]} : vector<8x128xf32> to vector<8x32xf32>
    %169 = arith.mulf %162, %149 : vector<8x32xf32>
    %170 = arith.mulf %161, %167 : vector<8x32xf32>
    %171 = arith.addf %169, %170 : vector<8x32xf32>
    %172 = math.tanh %171 : vector<8x32xf32>
    %173 = arith.mulf %168, %172 : vector<8x32xf32>
    %174 = vector.extract_strided_slice %7 {offsets = [7, 0, 0], sizes = [1, 8, 128], strides = [1, 1, 1]} : vector<8x8x128xf32> to vector<1x8x128xf32>
    %175 = vector.shape_cast %174 : vector<1x8x128xf32> to vector<8x128xf32>
    %cst_48 = arith.constant dense<0.000000e+00> : vector<8x128xf32>
    %176 = tpu.matmul %173, %16, %cst_48 {dimension_numbers = #tpu.dot_dimension_numbers<[1], [0], [0], [1], [0, 0, 1, 1], [], []>} : vector<8x32xf32>, vector<32x128xf32>, vector<8x128xf32> -> vector<8x128xf32>
    %177 = arith.addf %175, %176 : vector<8x128xf32>
    %178 = arith.negf %177 : vector<8x128xf32>
    %179 = math.exp %178 : vector<8x128xf32>
    %cst_49 = arith.constant 1.000000e+00 : f32
    %180 = vector.broadcast %cst_49 : f32 to vector<8x128xf32>
    %181 = arith.addf %180, %179 : vector<8x128xf32>
    %182 = arith.divf %180, %181 : vector<8x128xf32>
    %183 = vector.extract_strided_slice %182 {offsets = [0, 0], sizes = [8, 32], strides = [1, 1]} : vector<8x128xf32> to vector<8x32xf32>
    %184 = vector.extract_strided_slice %182 {offsets = [0, 32], sizes = [8, 32], strides = [1, 1]} : vector<8x128xf32> to vector<8x32xf32>
    %185 = vector.extract_strided_slice %182 {offsets = [0, 64], sizes = [8, 32], strides = [1, 1]} : vector<8x128xf32> to vector<8x32xf32>
    %cst_50 = arith.constant 2.000000e+00 : f32
    %186 = vector.broadcast %cst_50 : f32 to vector<8x32xf32>
    %187 = arith.mulf %186, %185 : vector<8x32xf32>
    %cst_51 = arith.constant 1.000000e+00 : f32
    %188 = vector.broadcast %cst_51 : f32 to vector<8x32xf32>
    %189 = arith.subf %187, %188 : vector<8x32xf32>
    %190 = vector.extract_strided_slice %182 {offsets = [0, 96], sizes = [8, 32], strides = [1, 1]} : vector<8x128xf32> to vector<8x32xf32>
    %191 = arith.mulf %184, %171 : vector<8x32xf32>
    %192 = arith.mulf %183, %189 : vector<8x32xf32>
    %193 = arith.addf %191, %192 : vector<8x32xf32>
    %194 = math.tanh %193 : vector<8x32xf32>
    %195 = arith.mulf %190, %194 : vector<8x32xf32>
    %196 = vector.extract_strided_slice %15 {offsets = [0, 0, 0], sizes = [1, 8, 128], strides = [1, 1, 1]} : vector<8x8x128xf32> to vector<1x8x128xf32>
    %197 = vector.shape_cast %196 : vector<1x8x128xf32> to vector<8x128xf32>
    %cst_52 = arith.constant dense<0.000000e+00> : vector<8x128xf32>
    %198 = tpu.matmul %195, %17, %cst_52 {dimension_numbers = #tpu.dot_dimension_numbers<[1], [0], [0], [1], [0, 0, 1, 1], [], []>} : vector<8x32xf32>, vector<32x128xf32>, vector<8x128xf32> -> vector<8x128xf32>
    %199 = arith.addf %197, %198 : vector<8x128xf32>
    %200 = arith.negf %199 : vector<8x128xf32>
    %201 = math.exp %200 : vector<8x128xf32>
    %cst_53 = arith.constant 1.000000e+00 : f32
    %202 = vector.broadcast %cst_53 : f32 to vector<8x128xf32>
    %203 = arith.addf %202, %201 : vector<8x128xf32>
    %204 = arith.divf %202, %203 : vector<8x128xf32>
    %205 = vector.extract_strided_slice %204 {offsets = [0, 0], sizes = [8, 32], strides = [1, 1]} : vector<8x128xf32> to vector<8x32xf32>
    %206 = vector.extract_strided_slice %204 {offsets = [0, 32], sizes = [8, 32], strides = [1, 1]} : vector<8x128xf32> to vector<8x32xf32>
    %207 = vector.extract_strided_slice %204 {offsets = [0, 64], sizes = [8, 32], strides = [1, 1]} : vector<8x128xf32> to vector<8x32xf32>
    %cst_54 = arith.constant 2.000000e+00 : f32
    %208 = vector.broadcast %cst_54 : f32 to vector<8x32xf32>
    %209 = arith.mulf %208, %207 : vector<8x32xf32>
    %cst_55 = arith.constant 1.000000e+00 : f32
    %210 = vector.broadcast %cst_55 : f32 to vector<8x32xf32>
    %211 = arith.subf %209, %210 : vector<8x32xf32>
    %212 = vector.extract_strided_slice %204 {offsets = [0, 96], sizes = [8, 32], strides = [1, 1]} : vector<8x128xf32> to vector<8x32xf32>
    %213 = arith.mulf %206, %193 : vector<8x32xf32>
    %214 = arith.mulf %205, %211 : vector<8x32xf32>
    %215 = arith.addf %213, %214 : vector<8x32xf32>
    %216 = math.tanh %215 : vector<8x32xf32>
    %217 = arith.mulf %212, %216 : vector<8x32xf32>
    %c0_56 = arith.constant 0 : index
    %c0_57 = arith.constant 0 : index
    %218 = vector.load %arg12[%c0_56, %c0_57] : memref<64x32xf32, #tpu.memory_space<vmem>>, vector<8x32xf32>
    tpu.vector_store %arg12[%c0_56, %c0_57], %217 {strides = array<i32>} : memref<64x32xf32, #tpu.memory_space<vmem>>, vector<8x32xf32>,
    %219 = vector.extract_strided_slice %15 {offsets = [1, 0, 0], sizes = [1, 8, 128], strides = [1, 1, 1]} : vector<8x8x128xf32> to vector<1x8x128xf32>
    %220 = vector.shape_cast %219 : vector<1x8x128xf32> to vector<8x128xf32>
    %cst_58 = arith.constant dense<0.000000e+00> : vector<8x128xf32>
    %221 = tpu.matmul %217, %17, %cst_58 {dimension_numbers = #tpu.dot_dimension_numbers<[1], [0], [0], [1], [0, 0, 1, 1], [], []>} : vector<8x32xf32>, vector<32x128xf32>, vector<8x128xf32> -> vector<8x128xf32>
    %222 = arith.addf %220, %221 : vector<8x128xf32>
    %223 = arith.negf %222 : vector<8x128xf32>
    %224 = math.exp %223 : vector<8x128xf32>
    %cst_59 = arith.constant 1.000000e+00 : f32
    %225 = vector.broadcast %cst_59 : f32 to vector<8x128xf32>
    %226 = arith.addf %225, %224 : vector<8x128xf32>
    %227 = arith.divf %225, %226 : vector<8x128xf32>
    %228 = vector.extract_strided_slice %227 {offsets = [0, 0], sizes = [8, 32], strides = [1, 1]} : vector<8x128xf32> to vector<8x32xf32>
    %229 = vector.extract_strided_slice %227 {offsets = [0, 32], sizes = [8, 32], strides = [1, 1]} : vector<8x128xf32> to vector<8x32xf32>
    %230 = vector.extract_strided_slice %227 {offsets = [0, 64], sizes = [8, 32], strides = [1, 1]} : vector<8x128xf32> to vector<8x32xf32>
    %cst_60 = arith.constant 2.000000e+00 : f32
    %231 = vector.broadcast %cst_60 : f32 to vector<8x32xf32>
    %232 = arith.mulf %231, %230 : vector<8x32xf32>
    %cst_61 = arith.constant 1.000000e+00 : f32
    %233 = vector.broadcast %cst_61 : f32 to vector<8x32xf32>
    %234 = arith.subf %232, %233 : vector<8x32xf32>
    %235 = vector.extract_strided_slice %227 {offsets = [0, 96], sizes = [8, 32], strides = [1, 1]} : vector<8x128xf32> to vector<8x32xf32>
    %236 = arith.mulf %229, %215 : vector<8x32xf32>
    %237 = arith.mulf %228, %234 : vector<8x32xf32>
    %238 = arith.addf %236, %237 : vector<8x32xf32>
    %239 = math.tanh %238 : vector<8x32xf32>
    %240 = arith.mulf %235, %239 : vector<8x32xf32>
    %c8 = arith.constant 8 : index
    %c0_62 = arith.constant 0 : index
    %241 = vector.load %arg12[%c8, %c0_62] : memref<64x32xf32, #tpu.memory_space<vmem>>, vector<8x32xf32>
    tpu.vector_store %arg12[%c8, %c0_62], %240 {strides = array<i32>} : memref<64x32xf32, #tpu.memory_space<vmem>>, vector<8x32xf32>,
    %242 = vector.extract_strided_slice %15 {offsets = [2, 0, 0], sizes = [1, 8, 128], strides = [1, 1, 1]} : vector<8x8x128xf32> to vector<1x8x128xf32>
    %243 = vector.shape_cast %242 : vector<1x8x128xf32> to vector<8x128xf32>
    %cst_63 = arith.constant dense<0.000000e+00> : vector<8x128xf32>
    %244 = tpu.matmul %240, %17, %cst_63 {dimension_numbers = #tpu.dot_dimension_numbers<[1], [0], [0], [1], [0, 0, 1, 1], [], []>} : vector<8x32xf32>, vector<32x128xf32>, vector<8x128xf32> -> vector<8x128xf32>
    %245 = arith.addf %243, %244 : vector<8x128xf32>
    %246 = arith.negf %245 : vector<8x128xf32>
    %247 = math.exp %246 : vector<8x128xf32>
    %cst_64 = arith.constant 1.000000e+00 : f32
    %248 = vector.broadcast %cst_64 : f32 to vector<8x128xf32>
    %249 = arith.addf %248, %247 : vector<8x128xf32>
    %250 = arith.divf %248, %249 : vector<8x128xf32>
    %251 = vector.extract_strided_slice %250 {offsets = [0, 0], sizes = [8, 32], strides = [1, 1]} : vector<8x128xf32> to vector<8x32xf32>
    %252 = vector.extract_strided_slice %250 {offsets = [0, 32], sizes = [8, 32], strides = [1, 1]} : vector<8x128xf32> to vector<8x32xf32>
    %253 = vector.extract_strided_slice %250 {offsets = [0, 64], sizes = [8, 32], strides = [1, 1]} : vector<8x128xf32> to vector<8x32xf32>
    %cst_65 = arith.constant 2.000000e+00 : f32
    %254 = vector.broadcast %cst_65 : f32 to vector<8x32xf32>
    %255 = arith.mulf %254, %253 : vector<8x32xf32>
    %cst_66 = arith.constant 1.000000e+00 : f32
    %256 = vector.broadcast %cst_66 : f32 to vector<8x32xf32>
    %257 = arith.subf %255, %256 : vector<8x32xf32>
    %258 = vector.extract_strided_slice %250 {offsets = [0, 96], sizes = [8, 32], strides = [1, 1]} : vector<8x128xf32> to vector<8x32xf32>
    %259 = arith.mulf %252, %238 : vector<8x32xf32>
    %260 = arith.mulf %251, %257 : vector<8x32xf32>
    %261 = arith.addf %259, %260 : vector<8x32xf32>
    %262 = math.tanh %261 : vector<8x32xf32>
    %263 = arith.mulf %258, %262 : vector<8x32xf32>
    %c16 = arith.constant 16 : index
    %c0_67 = arith.constant 0 : index
    %264 = vector.load %arg12[%c16, %c0_67] : memref<64x32xf32, #tpu.memory_space<vmem>>, vector<8x32xf32>
    tpu.vector_store %arg12[%c16, %c0_67], %263 {strides = array<i32>} : memref<64x32xf32, #tpu.memory_space<vmem>>, vector<8x32xf32>,
    %265 = vector.extract_strided_slice %15 {offsets = [3, 0, 0], sizes = [1, 8, 128], strides = [1, 1, 1]} : vector<8x8x128xf32> to vector<1x8x128xf32>
    %266 = vector.shape_cast %265 : vector<1x8x128xf32> to vector<8x128xf32>
    %cst_68 = arith.constant dense<0.000000e+00> : vector<8x128xf32>
    %267 = tpu.matmul %263, %17, %cst_68 {dimension_numbers = #tpu.dot_dimension_numbers<[1], [0], [0], [1], [0, 0, 1, 1], [], []>} : vector<8x32xf32>, vector<32x128xf32>, vector<8x128xf32> -> vector<8x128xf32>
    %268 = arith.addf %266, %267 : vector<8x128xf32>
    %269 = arith.negf %268 : vector<8x128xf32>
    %270 = math.exp %269 : vector<8x128xf32>
    %cst_69 = arith.constant 1.000000e+00 : f32
    %271 = vector.broadcast %cst_69 : f32 to vector<8x128xf32>
    %272 = arith.addf %271, %270 : vector<8x128xf32>
    %273 = arith.divf %271, %272 : vector<8x128xf32>
    %274 = vector.extract_strided_slice %273 {offsets = [0, 0], sizes = [8, 32], strides = [1, 1]} : vector<8x128xf32> to vector<8x32xf32>
    %275 = vector.extract_strided_slice %273 {offsets = [0, 32], sizes = [8, 32], strides = [1, 1]} : vector<8x128xf32> to vector<8x32xf32>
    %276 = vector.extract_strided_slice %273 {offsets = [0, 64], sizes = [8, 32], strides = [1, 1]} : vector<8x128xf32> to vector<8x32xf32>
    %cst_70 = arith.constant 2.000000e+00 : f32
    %277 = vector.broadcast %cst_70 : f32 to vector<8x32xf32>
    %278 = arith.mulf %277, %276 : vector<8x32xf32>
    %cst_71 = arith.constant 1.000000e+00 : f32
    %279 = vector.broadcast %cst_71 : f32 to vector<8x32xf32>
    %280 = arith.subf %278, %279 : vector<8x32xf32>
    %281 = vector.extract_strided_slice %273 {offsets = [0, 96], sizes = [8, 32], strides = [1, 1]} : vector<8x128xf32> to vector<8x32xf32>
    %282 = arith.mulf %275, %261 : vector<8x32xf32>
    %283 = arith.mulf %274, %280 : vector<8x32xf32>
    %284 = arith.addf %282, %283 : vector<8x32xf32>
    %285 = math.tanh %284 : vector<8x32xf32>
    %286 = arith.mulf %281, %285 : vector<8x32xf32>
    %c24 = arith.constant 24 : index
    %c0_72 = arith.constant 0 : index
    %287 = vector.load %arg12[%c24, %c0_72] : memref<64x32xf32, #tpu.memory_space<vmem>>, vector<8x32xf32>
    tpu.vector_store %arg12[%c24, %c0_72], %286 {strides = array<i32>} : memref<64x32xf32, #tpu.memory_space<vmem>>, vector<8x32xf32>,
    %288 = vector.extract_strided_slice %15 {offsets = [4, 0, 0], sizes = [1, 8, 128], strides = [1, 1, 1]} : vector<8x8x128xf32> to vector<1x8x128xf32>
    %289 = vector.shape_cast %288 : vector<1x8x128xf32> to vector<8x128xf32>
    %cst_73 = arith.constant dense<0.000000e+00> : vector<8x128xf32>
    %290 = tpu.matmul %286, %17, %cst_73 {dimension_numbers = #tpu.dot_dimension_numbers<[1], [0], [0], [1], [0, 0, 1, 1], [], []>} : vector<8x32xf32>, vector<32x128xf32>, vector<8x128xf32> -> vector<8x128xf32>
    %291 = arith.addf %289, %290 : vector<8x128xf32>
    %292 = arith.negf %291 : vector<8x128xf32>
    %293 = math.exp %292 : vector<8x128xf32>
    %cst_74 = arith.constant 1.000000e+00 : f32
    %294 = vector.broadcast %cst_74 : f32 to vector<8x128xf32>
    %295 = arith.addf %294, %293 : vector<8x128xf32>
    %296 = arith.divf %294, %295 : vector<8x128xf32>
    %297 = vector.extract_strided_slice %296 {offsets = [0, 0], sizes = [8, 32], strides = [1, 1]} : vector<8x128xf32> to vector<8x32xf32>
    %298 = vector.extract_strided_slice %296 {offsets = [0, 32], sizes = [8, 32], strides = [1, 1]} : vector<8x128xf32> to vector<8x32xf32>
    %299 = vector.extract_strided_slice %296 {offsets = [0, 64], sizes = [8, 32], strides = [1, 1]} : vector<8x128xf32> to vector<8x32xf32>
    %cst_75 = arith.constant 2.000000e+00 : f32
    %300 = vector.broadcast %cst_75 : f32 to vector<8x32xf32>
    %301 = arith.mulf %300, %299 : vector<8x32xf32>
    %cst_76 = arith.constant 1.000000e+00 : f32
    %302 = vector.broadcast %cst_76 : f32 to vector<8x32xf32>
    %303 = arith.subf %301, %302 : vector<8x32xf32>
    %304 = vector.extract_strided_slice %296 {offsets = [0, 96], sizes = [8, 32], strides = [1, 1]} : vector<8x128xf32> to vector<8x32xf32>
    %305 = arith.mulf %298, %284 : vector<8x32xf32>
    %306 = arith.mulf %297, %303 : vector<8x32xf32>
    %307 = arith.addf %305, %306 : vector<8x32xf32>
    %308 = math.tanh %307 : vector<8x32xf32>
    %309 = arith.mulf %304, %308 : vector<8x32xf32>
    %c32 = arith.constant 32 : index
    %c0_77 = arith.constant 0 : index
    %310 = vector.load %arg12[%c32, %c0_77] : memref<64x32xf32, #tpu.memory_space<vmem>>, vector<8x32xf32>
    tpu.vector_store %arg12[%c32, %c0_77], %309 {strides = array<i32>} : memref<64x32xf32, #tpu.memory_space<vmem>>, vector<8x32xf32>,
    %311 = vector.extract_strided_slice %15 {offsets = [5, 0, 0], sizes = [1, 8, 128], strides = [1, 1, 1]} : vector<8x8x128xf32> to vector<1x8x128xf32>
    %312 = vector.shape_cast %311 : vector<1x8x128xf32> to vector<8x128xf32>
    %cst_78 = arith.constant dense<0.000000e+00> : vector<8x128xf32>
    %313 = tpu.matmul %309, %17, %cst_78 {dimension_numbers = #tpu.dot_dimension_numbers<[1], [0], [0], [1], [0, 0, 1, 1], [], []>} : vector<8x32xf32>, vector<32x128xf32>, vector<8x128xf32> -> vector<8x128xf32>
    %314 = arith.addf %312, %313 : vector<8x128xf32>
    %315 = arith.negf %314 : vector<8x128xf32>
    %316 = math.exp %315 : vector<8x128xf32>
    %cst_79 = arith.constant 1.000000e+00 : f32
    %317 = vector.broadcast %cst_79 : f32 to vector<8x128xf32>
    %318 = arith.addf %317, %316 : vector<8x128xf32>
    %319 = arith.divf %317, %318 : vector<8x128xf32>
    %320 = vector.extract_strided_slice %319 {offsets = [0, 0], sizes = [8, 32], strides = [1, 1]} : vector<8x128xf32> to vector<8x32xf32>
    %321 = vector.extract_strided_slice %319 {offsets = [0, 32], sizes = [8, 32], strides = [1, 1]} : vector<8x128xf32> to vector<8x32xf32>
    %322 = vector.extract_strided_slice %319 {offsets = [0, 64], sizes = [8, 32], strides = [1, 1]} : vector<8x128xf32> to vector<8x32xf32>
    %cst_80 = arith.constant 2.000000e+00 : f32
    %323 = vector.broadcast %cst_80 : f32 to vector<8x32xf32>
    %324 = arith.mulf %323, %322 : vector<8x32xf32>
    %cst_81 = arith.constant 1.000000e+00 : f32
    %325 = vector.broadcast %cst_81 : f32 to vector<8x32xf32>
    %326 = arith.subf %324, %325 : vector<8x32xf32>
    %327 = vector.extract_strided_slice %319 {offsets = [0, 96], sizes = [8, 32], strides = [1, 1]} : vector<8x128xf32> to vector<8x32xf32>
    %328 = arith.mulf %321, %307 : vector<8x32xf32>
    %329 = arith.mulf %320, %326 : vector<8x32xf32>
    %330 = arith.addf %328, %329 : vector<8x32xf32>
    %331 = math.tanh %330 : vector<8x32xf32>
    %332 = arith.mulf %327, %331 : vector<8x32xf32>
    %c40 = arith.constant 40 : index
    %c0_82 = arith.constant 0 : index
    %333 = vector.load %arg12[%c40, %c0_82] : memref<64x32xf32, #tpu.memory_space<vmem>>, vector<8x32xf32>
    tpu.vector_store %arg12[%c40, %c0_82], %332 {strides = array<i32>} : memref<64x32xf32, #tpu.memory_space<vmem>>, vector<8x32xf32>,
    %334 = vector.extract_strided_slice %15 {offsets = [6, 0, 0], sizes = [1, 8, 128], strides = [1, 1, 1]} : vector<8x8x128xf32> to vector<1x8x128xf32>
    %335 = vector.shape_cast %334 : vector<1x8x128xf32> to vector<8x128xf32>
    %cst_83 = arith.constant dense<0.000000e+00> : vector<8x128xf32>
    %336 = tpu.matmul %332, %17, %cst_83 {dimension_numbers = #tpu.dot_dimension_numbers<[1], [0], [0], [1], [0, 0, 1, 1], [], []>} : vector<8x32xf32>, vector<32x128xf32>, vector<8x128xf32> -> vector<8x128xf32>
    %337 = arith.addf %335, %336 : vector<8x128xf32>
    %338 = arith.negf %337 : vector<8x128xf32>
    %339 = math.exp %338 : vector<8x128xf32>
    %cst_84 = arith.constant 1.000000e+00 : f32
    %340 = vector.broadcast %cst_84 : f32 to vector<8x128xf32>
    %341 = arith.addf %340, %339 : vector<8x128xf32>
    %342 = arith.divf %340, %341 : vector<8x128xf32>
    %343 = vector.extract_strided_slice %342 {offsets = [0, 0], sizes = [8, 32], strides = [1, 1]} : vector<8x128xf32> to vector<8x32xf32>
    %344 = vector.extract_strided_slice %342 {offsets = [0, 32], sizes = [8, 32], strides = [1, 1]} : vector<8x128xf32> to vector<8x32xf32>
    %345 = vector.extract_strided_slice %342 {offsets = [0, 64], sizes = [8, 32], strides = [1, 1]} : vector<8x128xf32> to vector<8x32xf32>
    %cst_85 = arith.constant 2.000000e+00 : f32
    %346 = vector.broadcast %cst_85 : f32 to vector<8x32xf32>
    %347 = arith.mulf %346, %345 : vector<8x32xf32>
    %cst_86 = arith.constant 1.000000e+00 : f32
    %348 = vector.broadcast %cst_86 : f32 to vector<8x32xf32>
    %349 = arith.subf %347, %348 : vector<8x32xf32>
    %350 = vector.extract_strided_slice %342 {offsets = [0, 96], sizes = [8, 32], strides = [1, 1]} : vector<8x128xf32> to vector<8x32xf32>
    %351 = arith.mulf %344, %330 : vector<8x32xf32>
    %352 = arith.mulf %343, %349 : vector<8x32xf32>
    %353 = arith.addf %351, %352 : vector<8x32xf32>
    %354 = math.tanh %353 : vector<8x32xf32>
    %355 = arith.mulf %350, %354 : vector<8x32xf32>
    %c48 = arith.constant 48 : index
    %c0_87 = arith.constant 0 : index
    %356 = vector.load %arg12[%c48, %c0_87] : memref<64x32xf32, #tpu.memory_space<vmem>>, vector<8x32xf32>
    tpu.vector_store %arg12[%c48, %c0_87], %355 {strides = array<i32>} : memref<64x32xf32, #tpu.memory_space<vmem>>, vector<8x32xf32>,
    %357 = vector.extract_strided_slice %15 {offsets = [7, 0, 0], sizes = [1, 8, 128], strides = [1, 1, 1]} : vector<8x8x128xf32> to vector<1x8x128xf32>
    %358 = vector.shape_cast %357 : vector<1x8x128xf32> to vector<8x128xf32>
    %cst_88 = arith.constant dense<0.000000e+00> : vector<8x128xf32>
    %359 = tpu.matmul %355, %17, %cst_88 {dimension_numbers = #tpu.dot_dimension_numbers<[1], [0], [0], [1], [0, 0, 1, 1], [], []>} : vector<8x32xf32>, vector<32x128xf32>, vector<8x128xf32> -> vector<8x128xf32>
    %360 = arith.addf %358, %359 : vector<8x128xf32>
    %361 = arith.negf %360 : vector<8x128xf32>
    %362 = math.exp %361 : vector<8x128xf32>
    %cst_89 = arith.constant 1.000000e+00 : f32
    %363 = vector.broadcast %cst_89 : f32 to vector<8x128xf32>
    %364 = arith.addf %363, %362 : vector<8x128xf32>
    %365 = arith.divf %363, %364 : vector<8x128xf32>
    %366 = vector.extract_strided_slice %365 {offsets = [0, 0], sizes = [8, 32], strides = [1, 1]} : vector<8x128xf32> to vector<8x32xf32>
    %367 = vector.extract_strided_slice %365 {offsets = [0, 32], sizes = [8, 32], strides = [1, 1]} : vector<8x128xf32> to vector<8x32xf32>
    %368 = vector.extract_strided_slice %365 {offsets = [0, 64], sizes = [8, 32], strides = [1, 1]} : vector<8x128xf32> to vector<8x32xf32>
    %cst_90 = arith.constant 2.000000e+00 : f32
    %369 = vector.broadcast %cst_90 : f32 to vector<8x32xf32>
    %370 = arith.mulf %369, %368 : vector<8x32xf32>
    %cst_91 = arith.constant 1.000000e+00 : f32
    %371 = vector.broadcast %cst_91 : f32 to vector<8x32xf32>
    %372 = arith.subf %370, %371 : vector<8x32xf32>
    %373 = vector.extract_strided_slice %365 {offsets = [0, 96], sizes = [8, 32], strides = [1, 1]} : vector<8x128xf32> to vector<8x32xf32>
    %374 = arith.mulf %367, %353 : vector<8x32xf32>
    %375 = arith.mulf %366, %372 : vector<8x32xf32>
    %376 = arith.addf %374, %375 : vector<8x32xf32>
    %377 = math.tanh %376 : vector<8x32xf32>
    %378 = arith.mulf %373, %377 : vector<8x32xf32>
    %c56 = arith.constant 56 : index
    %c0_92 = arith.constant 0 : index
    %379 = vector.load %arg12[%c56, %c0_92] : memref<64x32xf32, #tpu.memory_space<vmem>>, vector<8x32xf32>
    tpu.vector_store %arg12[%c56, %c0_92], %378 {strides = array<i32>} : memref<64x32xf32, #tpu.memory_space<vmem>>, vector<8x32xf32>,
    %c0_93 = arith.constant 0 : index
    %c0_94 = arith.constant 0 : index
    %380 = vector.load %arg12[%c0_93, %c0_94] : memref<64x32xf32, #tpu.memory_space<vmem>>, vector<64x32xf32>
    %c0_95 = arith.constant 0 : index
    %c0_96 = arith.constant 0 : index
    %381 = vector.load %arg9[%c0_95, %c0_96] : memref<32x128xf32, #tpu.memory_space<vmem>>, vector<32x128xf32>
    %cst_97 = arith.constant dense<0.000000e+00> : vector<64x128xf32>
    %382 = tpu.matmul %380, %381, %cst_97 {dimension_numbers = #tpu.dot_dimension_numbers<[1], [0], [0], [1], [0, 0, 1, 1], [], []>} : vector<64x32xf32>, vector<32x128xf32>, vector<64x128xf32> -> vector<64x128xf32>
    %c0_98 = arith.constant 0 : index
    %c0_99 = arith.constant 0 : index
    %383 = vector.load %arg10[%c0_98, %c0_99] : memref<1x128xf32, #tpu.memory_space<vmem>>, vector<1x128xf32>
    %384 = vector.broadcast %383 : vector<1x128xf32> to vector<64x128xf32>
    %385 = arith.addf %382, %384 : vector<64x128xf32>
    %386 = vector.shape_cast %385 : vector<64x128xf32> to vector<8x8x128xf32>
    %c0_100 = arith.constant 0 : index
    %c0_101 = arith.constant 0 : index
    %c0_102 = arith.constant 0 : index
    %387 = vector.load %arg11[%c0_100, %c0_101, %c0_102] : memref<8x8x128xf32, #tpu.memory_space<vmem>>, vector<8x8x128xf32>
    tpu.vector_store %arg11[%c0_100, %c0_101, %c0_102], %386 {strides = array<i32>} : memref<8x8x128xf32, #tpu.memory_space<vmem>>, vector<8x8x128xf32>,
    return
  }
  func.func @transform_0(%arg0: i32) -> (i32, i32, i32) {
    %c0_i32 = arith.constant 0 : i32
    %c0_i32_0 = arith.constant 0 : i32
    %c0_i32_1 = arith.constant 0 : i32
    return %c0_i32, %arg0, %c0_i32_0 : i32, i32, i32
  }
  func.func @transform_1(%arg0: i32) -> (i32, i32, i32) {
    %c0_i32 = arith.constant 0 : i32
    %c0_i32_0 = arith.constant 0 : i32
    %c0_i32_1 = arith.constant 0 : i32
    return %c0_i32, %arg0, %c0_i32_0 : i32, i32, i32
  }
  func.func @transform_2(%arg0: i32) -> (i32, i32) {
    %c0_i32 = arith.constant 0 : i32
    %c0_i32_0 = arith.constant 0 : i32
    %c0_i32_1 = arith.constant 0 : i32
    return %c0_i32, %c0_i32_0 : i32, i32
  }
  func.func @transform_3(%arg0: i32) -> (i32, i32) {
    %c0_i32 = arith.constant 0 : i32
    %c0_i32_0 = arith.constant 0 : i32
    %c0_i32_1 = arith.constant 0 : i32
    return %c0_i32, %c0_i32_0 : i32, i32
  }
  func.func @transform_4(%arg0: i32) -> (i32, i32) {
    %c0_i32 = arith.constant 0 : i32
    %c0_i32_0 = arith.constant 0 : i32
    %c0_i32_1 = arith.constant 0 : i32
    return %c0_i32, %c0_i32_0 : i32, i32
  }
  func.func @transform_5(%arg0: i32) -> (i32, i32) {
    %c0_i32 = arith.constant 0 : i32
    %c0_i32_0 = arith.constant 0 : i32
    %c0_i32_1 = arith.constant 0 : i32
    return %c0_i32, %c0_i32_0 : i32, i32
  }
  func.func @transform_6(%arg0: i32) -> (i32, i32) {
    %c0_i32 = arith.constant 0 : i32
    %c0_i32_0 = arith.constant 0 : i32
    %c0_i32_1 = arith.constant 0 : i32
    return %c0_i32, %c0_i32_0 : i32, i32
  }
  func.func @transform_7(%arg0: i32) -> (i32, i32) {
    %c0_i32 = arith.constant 0 : i32
    %c0_i32_0 = arith.constant 0 : i32
    %c0_i32_1 = arith.constant 0 : i32
    return %c0_i32, %c0_i32_0 : i32, i32
  }
  func.func @transform_8(%arg0: i32) -> (i32, i32) {
    %c0_i32 = arith.constant 0 : i32
    %c0_i32_0 = arith.constant 0 : i32
    %c0_i32_1 = arith.constant 0 : i32
    return %c0_i32, %c0_i32_0 : i32, i32
  }
  func.func @transform_9(%arg0: i32) -> (i32, i32) {
    %c0_i32 = arith.constant 0 : i32
    %c0_i32_0 = arith.constant 0 : i32
    %c0_i32_1 = arith.constant 0 : i32
    return %c0_i32, %c0_i32_0 : i32, i32
  }
  func.func @transform_10(%arg0: i32) -> (i32, i32, i32) {
    %c0_i32 = arith.constant 0 : i32
    %c0_i32_0 = arith.constant 0 : i32
    %c0_i32_1 = arith.constant 0 : i32
    return %c0_i32, %arg0, %c0_i32_0 : i32, i32, i32
  }
}

</mosaic_0001>

<llo_original>
// kernel: seq2seq_forward.1
$region0: #{seq2seq_forward.1}
  #allocation0 [shape = 'u32[]', space=smem, size = 0x4, offset = 0x4, fixed_abs, tag = 'smem constant byte address 0x4 - core index']
  #allocation1 [shape = 'u32[144,128]{1,0:T(1,128)}', space=vmem, size = 0x12000, scoped, tag = 'internal scratch']
  #allocation2 [shape = 'f32[64,32]{1,0:T(8,128)}', space=vmem, size = 0x8000, scoped, tag = 'scratch operand']
  %s0 = inlined_call_operand.vmem [shape: f32[8,8,16], index: 0, kind: input, shape index: {}]
  %s1 = inlined_call_operand.vmem [shape: f32[8,8,16], index: 1, kind: input, shape index: {}]
  %s2 = inlined_call_operand.vmem [shape: f32[16,128], index: 2, kind: input, shape index: {}]
  %s3 = inlined_call_operand.vmem [shape: f32[32,128], index: 3, kind: input, shape index: {}]
  %s4 = inlined_call_operand.vmem [shape: f32[1,128], index: 4, kind: input, shape index: {}]
  %s5 = inlined_call_operand.vmem [shape: f32[16,128], index: 5, kind: input, shape index: {}]
  %s6 = inlined_call_operand.vmem [shape: f32[32,128], index: 6, kind: input, shape index: {}]
  %s7 = inlined_call_operand.vmem [shape: f32[1,128], index: 7, kind: input, shape index: {}]
  %s8 = inlined_call_operand.vmem [shape: f32[32,128], index: 8, kind: input, shape index: {}]
  %s9 = inlined_call_operand.vmem [shape: f32[1,128], index: 9, kind: input, shape index: {}]
  %s10 = inlined_call_operand.vmem [shape: f32[8,8,128], index: 10, kind: output, shape index: {}]
  %s11 = sld [smem:[#allocation0]]
  $region50: #{seq2seq_forward.1} parent=0
    _
  %s13 = ssub.s32 1, %s11
  %s14 = scalar_select 0, %s13, %s11
  // Predicated region
  $region2: #{seq2seq_forward.1} parent=0 // pred_check
    _
  $region3: #{seq2seq_forward.1} parent=0 // pred_check_branch
    %16 = sbr.rel (0) target = $region5
  $region4: #{seq2seq_forward.1} parent=0 // pred_region
    _
  $region5: #{seq2seq_forward.1} parent=0 // pred_fallthru
    _
  // Predicated region
  $region6: #{seq2seq_forward.1} parent=0 // pred_check
    _
  $region7: #{seq2seq_forward.1} parent=0 // pred_check_branch
    %18 = sbr.rel (0) target = $region9
  $region8: #{seq2seq_forward.1} parent=0 // pred_region
    _
  $region9: #{seq2seq_forward.1} parent=0 // pred_fallthru
    _
  // Predicated region
  $region10: #{seq2seq_forward.1} parent=0 // pred_check
    _
  $region11: #{seq2seq_forward.1} parent=0 // pred_check_branch
    %20 = sbr.rel (0) target = $region13
  $region12: #{seq2seq_forward.1} parent=0 // pred_region
    _
  $region13: #{seq2seq_forward.1} parent=0 // pred_fallthru
    _
  // Predicated region
  $region14: #{seq2seq_forward.1} parent=0 // pred_check
    _
  $region15: #{seq2seq_forward.1} parent=0 // pred_check_branch
    %22 = sbr.rel (0) target = $region17
  $region16: #{seq2seq_forward.1} parent=0 // pred_region
    _
  $region17: #{seq2seq_forward.1} parent=0 // pred_fallthru
    _
  // Predicated region
  $region18: #{seq2seq_forward.1} parent=0 // pred_check
    _
  $region19: #{seq2seq_forward.1} parent=0 // pred_check_branch
    %24 = sbr.rel (0) target = $region21
  $region20: #{seq2seq_forward.1} parent=0 // pred_region
    _
  $region21: #{seq2seq_forward.1} parent=0 // pred_fallthru
    _
  // Predicated region
  $region22: #{seq2seq_forward.1} parent=0 // pred_check
    _
  $region23: #{seq2seq_forward.1} parent=0 // pred_check_branch
    %26 = sbr.rel (0) target = $region25
  $region24: #{seq2seq_forward.1} parent=0 // pred_region
    _
  $region25: #{seq2seq_forward.1} parent=0 // pred_fallthru
    _
  // Predicated region
  $region26: #{seq2seq_forward.1} parent=0 // pred_check
    _
  $region27: #{seq2seq_forward.1} parent=0 // pred_check_branch
    %28 = sbr.rel (0) target = $region29
  $region28: #{seq2seq_forward.1} parent=0 // pred_region
    _
  $region29: #{seq2seq_forward.1} parent=0 // pred_fallthru
    _
  // Predicated region
  $region30: #{seq2seq_forward.1} parent=0 // pred_check
    _
  $region31: #{seq2seq_forward.1} parent=0 // pred_check_branch
    %30 = sbr.rel (0) target = $region33
  $region32: #{seq2seq_forward.1} parent=0 // pred_region
    _
  $region33: #{seq2seq_forward.1} parent=0 // pred_fallthru
    _
  // Predicated region
  $region34: #{seq2seq_forward.1} parent=0 // pred_check
    _
  $region35: #{seq2seq_forward.1} parent=0 // pred_check_branch
    %32 = sbr.rel (0) target = $region37
  $region36: #{seq2seq_forward.1} parent=0 // pred_region
    _
  $region37: #{seq2seq_forward.1} parent=0 // pred_fallthru
    _
  // Predicated region
  $region38: #{seq2seq_forward.1} parent=0 // pred_check
    _
  $region39: #{seq2seq_forward.1} parent=0 // pred_check_branch
    %34 = sbr.rel (0) target = $region41
  $region40: #{seq2seq_forward.1} parent=0 // pred_region
    _
  $region41: #{seq2seq_forward.1} parent=0 // pred_fallthru
    _
  %v35 = vld [vmem:[%s0] sm:$0xff]
  %v36 = vld [vmem:[%s0 + $0x8] sm:$0xff]
  %v37 = vld [vmem:[%s0 + $0x10] sm:$0xff]
  %v38 = vld [vmem:[%s0 + $0x18] sm:$0xff]
  %v39 = vld [vmem:[%s0 + $0x20] sm:$0xff]
  %v40 = vld [vmem:[%s0 + $0x28] sm:$0xff]
  %v41 = vld [vmem:[%s0 + $0x30] sm:$0xff]
  %v42 = vld [vmem:[%s0 + $0x38] sm:$0xff]
  %v43 = vld [vmem:[%s2] sm:$0xff]
  %v44 = vld [vmem:[%s2 + $0x8] sm:$0xff]
  %v45 = vld [vmem:[%s4] sm:$0x1]
  %v47 = vlaneseq
  %v48 = vshrl.u32 %v47, 7
  %v49 = vsub.s32 0, %v48
  %v50 = vrot.slane %v45, %v49
  %vm52 = vcmask 130048
  %v54 = vsel %vm52, %v35, 0
  %v57 = vsel %vm52, %v36, 0
  %v60 = vsel %vm52, %v37, 0
  %v63 = vsel %vm52, %v38, 0
  %v66 = vsel %vm52, %v39, 0
  %v69 = vsel %vm52, %v40, 0
  %v72 = vsel %vm52, %v41, 0
  %v75 = vsel %vm52, %v42, 0
  %77 = vmatprep.subr.mxu0 0.0
  %78 = vmatpush1.msra.mxu0 0.0
  %79 = vmatprep.subr.mxu0 0.0
  %80 = vmatpush1.msra.mxu0 0.0
  %81 = vmatprep.subr.mxu0 0.0
  %82 = vmatpush1.msra.mxu0 0.0
  %83 = vmatprep.subr.mxu0 0.0
  %84 = vmatpush1.msra.mxu0 0.0
  %85 = vmatprep.subr.mxu0 0.0
  %86 = vmatpush1.msra.mxu0 0.0
  %87 = vmatprep.subr.mxu0 0.0
  %88 = vmatpush1.msra.mxu0 0.0
  %89 = vmatprep.subr.mxu0 0.0
  %90 = vmatpush1.msra.mxu0 0.0
  %91 = vmatprep.subr.mxu0 0.0
  %92 = vmatpush1.msra.mxu0 0.0
  %93 = vmatprep.subr.mxu0 0.0
  %94 = vmatpush1.msra.mxu0 0.0
  %95 = vmatprep.subr.mxu0 0.0
  %96 = vmatpush1.msra.mxu0 0.0
  %97 = vmatprep.subr.mxu0 0.0
  %98 = vmatpush1.msra.mxu0 0.0
  %99 = vmatprep.subr.mxu0 0.0
  %100 = vmatpush1.msra.mxu0 0.0
  %101 = vmatprep.subr.mxu0 0.0
  %102 = vmatpush1.msra.mxu0 0.0
  %103 = vmatprep.subr.mxu0 0.0
  %104 = vmatpush1.msra.mxu0 0.0
  %105 = vmatprep.subr.mxu0 0.0
  %106 = vmatpush1.msra.mxu0 %v44
  %107 = vmatprep.subr.mxu0 0.0
  %108 = vmatpush1.msra.mxu0 %v43
  %109 = vmatprep.subr.mxu0 0.0
  %110 = vmatpush2.msra.mxu0 0.0
  %111 = vmatprep.subr.mxu0 0.0
  %112 = vmatpush2.msra.mxu0 0.0
  %113 = vmatprep.subr.mxu0 0.0
  %114 = vmatpush2.msra.mxu0 0.0
  %115 = vmatprep.subr.mxu0 0.0
  %116 = vmatpush2.msra.mxu0 0.0
  %117 = vmatprep.subr.mxu0 0.0
  %118 = vmatpush2.msra.mxu0 0.0
  %119 = vmatprep.subr.mxu0 0.0
  %120 = vmatpush2.msra.mxu0 0.0
  %121 = vmatprep.subr.mxu0 0.0
  %122 = vmatpush2.msra.mxu0 0.0
  %123 = vmatprep.subr.mxu0 0.0
  %124 = vmatpush2.msra.mxu0 0.0
  %125 = vmatprep.subr.mxu0 0.0
  %126 = vmatpush2.msra.mxu0 0.0
  %127 = vmatprep.subr.mxu0 0.0
  %128 = vmatpush2.msra.mxu0 0.0
  %129 = vmatprep.subr.mxu0 0.0
  %130 = vmatpush2.msra.mxu0 0.0
  %131 = vmatprep.subr.mxu0 0.0
  %132 = vmatpush2.msra.mxu0 0.0
  %133 = vmatprep.subr.mxu0 0.0
  %134 = vmatpush2.msra.mxu0 0.0
  %135 = vmatprep.subr.mxu0 0.0
  %136 = vmatpush2.msra.mxu0 0.0
  %137 = vmatprep.subr.mxu0 0.0
  %138 = vmatpush2.msra.mxu0 0.0
  %139 = vmatprep.subr.mxu0 0.0
  %140 = vmatpush2.msra.mxu0 0.0
  %141 = vmatprep.mubr.f32.mxu0 0.0
  %142 = vmatmul.mubr.f32.gmra.mxu0 %v54
  %v143 = vpop.f32.mrf.mxu0
  %v144 = vadd.f32 %v50, %v143
  %v145 = vpop.f32.mrf.mxu0
  %146 = vmatprep.mubr.f32.mxu0 0.0
  %147 = vmatmul.mubr.f32.gmra.mxu0 %v57
  %v148 = vpop.f32.mrf.mxu0
  %v149 = vadd.f32 %v50, %v148
  %v150 = vpop.f32.mrf.mxu0
  %151 = vmatprep.mubr.f32.mxu0 0.0
  %152 = vmatmul.mubr.f32.gmra.mxu0 %v60
  %v153 = vpop.f32.mrf.mxu0
  %v154 = vadd.f32 %v50, %v153
  %v155 = vpop.f32.mrf.mxu0
  %156 = vmatprep.mubr.f32.mxu0 0.0
  %157 = vmatmul.mubr.f32.gmra.mxu0 %v63
  %v158 = vpop.f32.mrf.mxu0
  %v159 = vadd.f32 %v50, %v158
  %v160 = vpop.f32.mrf.mxu0
  %161 = vmatprep.mubr.f32.mxu0 0.0
  %162 = vmatmul.mubr.f32.gmra.mxu0 %v66
  %v163 = vpop.f32.mrf.mxu0
  %v164 = vadd.f32 %v50, %v163
  %v165 = vpop.f32.mrf.mxu0
  %166 = vmatprep.mubr.f32.mxu0 0.0
  %167 = vmatmul.mubr.f32.gmra.mxu0 %v69
  %v168 = vpop.f32.mrf.mxu0
  %v169 = vadd.f32 %v50, %v168
  %v170 = vpop.f32.mrf.mxu0
  %171 = vmatprep.mubr.f32.mxu0 0.0
  %172 = vmatmul.mubr.f32.gmra.mxu0 %v72
  %v173 = vpop.f32.mrf.mxu0
  %v174 = vadd.f32 %v50, %v173
  %v175 = vpop.f32.mrf.mxu0
  %176 = vmatprep.mubr.f32.mxu0 0.0
  %177 = vmatmul.mubr.f32.gmra.mxu0 %v75
  %v178 = vpop.f32.mrf.mxu0
  %v179 = vadd.f32 %v50, %v178
  %v180 = vpop.f32.mrf.mxu0
  %181 = vdwg.mxu0
  %v182 = vld [vmem:[%s1] sm:$0xff]
  %v183 = vld [vmem:[%s1 + $0x8] sm:$0xff]
  %v184 = vld [vmem:[%s1 + $0x10] sm:$0xff]
  %v185 = vld [vmem:[%s1 + $0x18] sm:$0xff]
  %v186 = vld [vmem:[%s1 + $0x20] sm:$0xff]
  %v187 = vld [vmem:[%s1 + $0x28] sm:$0xff]
  %v188 = vld [vmem:[%s1 + $0x30] sm:$0xff]
  %v189 = vld [vmem:[%s1 + $0x38] sm:$0xff]
  %v190 = vld [vmem:[%s5] sm:$0xff]
  %v191 = vld [vmem:[%s5 + $0x8] sm:$0xff]
  %v192 = vld [vmem:[%s7] sm:$0x1]
  %v194 = vlaneseq
  %v195 = vshrl.u32 %v194, 7
  %v196 = vsub.s32 0, %v195
  %v197 = vrot.slane %v192, %v196
  %v200 = vsel %vm52, %v182, 0
  %v203 = vsel %vm52, %v183, 0
  %v206 = vsel %vm52, %v184, 0
  %v209 = vsel %vm52, %v185, 0
  %v212 = vsel %vm52, %v186, 0
  %v215 = vsel %vm52, %v187, 0
  %v218 = vsel %vm52, %v188, 0
  %v221 = vsel %vm52, %v189, 0
  %223 = vmatprep.subr.mxu0 0.0
  %224 = vmatpush1.msra.mxu0 0.0
  %225 = vmatprep.subr.mxu0 0.0
  %226 = vmatpush1.msra.mxu0 0.0
  %227 = vmatprep.subr.mxu0 0.0
  %228 = vmatpush1.msra.mxu0 0.0
  %229 = vmatprep.subr.mxu0 0.0
  %230 = vmatpush1.msra.mxu0 0.0
  %231 = vmatprep.subr.mxu0 0.0
  %232 = vmatpush1.msra.mxu0 0.0
  %233 = vmatprep.subr.mxu0 0.0
  %234 = vmatpush1.msra.mxu0 0.0
  %235 = vmatprep.subr.mxu0 0.0
  %236 = vmatpush1.msra.mxu0 0.0
  %237 = vmatprep.subr.mxu0 0.0
  %238 = vmatpush1.msra.mxu0 0.0
  %239 = vmatprep.subr.mxu0 0.0
  %240 = vmatpush1.msra.mxu0 0.0
  %241 = vmatprep.subr.mxu0 0.0
  %242 = vmatpush1.msra.mxu0 0.0
  %243 = vmatprep.subr.mxu0 0.0
  %244 = vmatpush1.msra.mxu0 0.0
  %245 = vmatprep.subr.mxu0 0.0
  %246 = vmatpush1.msra.mxu0 0.0
  %247 = vmatprep.subr.mxu0 0.0
  %248 = vmatpush1.msra.mxu0 0.0
  %249 = vmatprep.subr.mxu0 0.0
  %250 = vmatpush1.msra.mxu0 0.0
  %251 = vmatprep.subr.mxu0 0.0
  %252 = vmatpush1.msra.mxu0 %v191
  %253 = vmatprep.subr.mxu0 0.0
  %254 = vmatpush1.msra.mxu0 %v190
  %255 = vmatprep.subr.mxu0 0.0
  %256 = vmatpush2.msra.mxu0 0.0
  %257 = vmatprep.subr.mxu0 0.0
  %258 = vmatpush2.msra.mxu0 0.0
  %259 = vmatprep.subr.mxu0 0.0
  %260 = vmatpush2.msra.mxu0 0.0
  %261 = vmatprep.subr.mxu0 0.0
  %262 = vmatpush2.msra.mxu0 0.0
  %263 = vmatprep.subr.mxu0 0.0
  %264 = vmatpush2.msra.mxu0 0.0
  %265 = vmatprep.subr.mxu0 0.0
  %266 = vmatpush2.msra.mxu0 0.0
  %267 = vmatprep.subr.mxu0 0.0
  %268 = vmatpush2.msra.mxu0 0.0
  %269 = vmatprep.subr.mxu0 0.0
  %270 = vmatpush2.msra.mxu0 0.0
  %271 = vmatprep.subr.mxu0 0.0
  %272 = vmatpush2.msra.mxu0 0.0
  %273 = vmatprep.subr.mxu0 0.0
  %274 = vmatpush2.msra.mxu0 0.0
  %275 = vmatprep.subr.mxu0 0.0
  %276 = vmatpush2.msra.mxu0 0.0
  %277 = vmatprep.subr.mxu0 0.0
  %278 = vmatpush2.msra.mxu0 0.0
  %279 = vmatprep.subr.mxu0 0.0
  %280 = vmatpush2.msra.mxu0 0.0
  %281 = vmatprep.subr.mxu0 0.0
  %282 = vmatpush2.msra.mxu0 0.0
  %283 = vmatprep.subr.mxu0 0.0
  %284 = vmatpush2.msra.mxu0 0.0
  %285 = vmatprep.subr.mxu0 0.0
  %286 = vmatpush2.msra.mxu0 0.0
  %287 = vmatprep.mubr.f32.mxu0 0.0
  %288 = vmatmul.mubr.f32.gmra.mxu0 %v200
  %v289 = vpop.f32.mrf.mxu0
  %v290 = vadd.f32 %v197, %v289
  %v291 = vpop.f32.mrf.mxu0
  %292 = vmatprep.mubr.f32.mxu0 0.0
  %293 = vmatmul.mubr.f32.gmra.mxu0 %v203
  %v294 = vpop.f32.mrf.mxu0
  %v295 = vadd.f32 %v197, %v294
  %v296 = vpop.f32.mrf.mxu0
  %297 = vmatprep.mubr.f32.mxu0 0.0
  %298 = vmatmul.mubr.f32.gmra.mxu0 %v206
  %v299 = vpop.f32.mrf.mxu0
  %v300 = vadd.f32 %v197, %v299
  %v301 = vpop.f32.mrf.mxu0
  %302 = vmatprep.mubr.f32.mxu0 0.0
  %303 = vmatmul.mubr.f32.gmra.mxu0 %v209
  %v304 = vpop.f32.mrf.mxu0
  %v305 = vadd.f32 %v197, %v304
  %v306 = vpop.f32.mrf.mxu0
  %307 = vmatprep.mubr.f32.mxu0 0.0
  %308 = vmatmul.mubr.f32.gmra.mxu0 %v212
  %v309 = vpop.f32.mrf.mxu0
  %v310 = vadd.f32 %v197, %v309
  %v311 = vpop.f32.mrf.mxu0
  %312 = vmatprep.mubr.f32.mxu0 0.0
  %313 = vmatmul.mubr.f32.gmra.mxu0 %v215
  %v314 = vpop.f32.mrf.mxu0
  %v315 = vadd.f32 %v197, %v314
  %v316 = vpop.f32.mrf.mxu0
  %317 = vmatprep.mubr.f32.mxu0 0.0
  %318 = vmatmul.mubr.f32.gmra.mxu0 %v218
  %v319 = vpop.f32.mrf.mxu0
  %v320 = vadd.f32 %v197, %v319
  %v321 = vpop.f32.mrf.mxu0
  %322 = vmatprep.mubr.f32.mxu0 0.0
  %323 = vmatmul.mubr.f32.gmra.mxu0 %v221
  %v324 = vpop.f32.mrf.mxu0
  %v325 = vadd.f32 %v197, %v324
  %v326 = vpop.f32.mrf.mxu0
  %327 = vdwg.mxu0
  %v328 = vld [vmem:[%s3] sm:$0xff]
  %v329 = vld [vmem:[%s3 + $0x8] sm:$0xff]
  %v330 = vld [vmem:[%s3 + $0x10] sm:$0xff]
  %v331 = vld [vmem:[%s3 + $0x18] sm:$0xff]
  %v332 = vld [vmem:[%s6] sm:$0xff]
  %v333 = vld [vmem:[%s6 + $0x8] sm:$0xff]
  %v334 = vld [vmem:[%s6 + $0x10] sm:$0xff]
  %v335 = vld [vmem:[%s6 + $0x18] sm:$0xff]
  %vm336 = vcmask 261120
  %v338 = vsel %vm336, 0.0, 0
  %340 = vmatprep.subr.mxu0 0.0
  %341 = vmatpush1.msra.mxu0 0.0
  %342 = vmatprep.subr.mxu0 0.0
  %343 = vmatpush1.msra.mxu0 0.0
  %344 = vmatprep.subr.mxu0 0.0
  %345 = vmatpush1.msra.mxu0 0.0
  %346 = vmatprep.subr.mxu0 0.0
  %347 = vmatpush1.msra.mxu0 0.0
  %348 = vmatprep.subr.mxu0 0.0
  %349 = vmatpush1.msra.mxu0 0.0
  %350 = vmatprep.subr.mxu0 0.0
  %351 = vmatpush1.msra.mxu0 0.0
  %352 = vmatprep.subr.mxu0 0.0
  %353 = vmatpush1.msra.mxu0 0.0
  %354 = vmatprep.subr.mxu0 0.0
  %355 = vmatpush1.msra.mxu0 0.0
  %356 = vmatprep.subr.mxu0 0.0
  %357 = vmatpush1.msra.mxu0 0.0
  %358 = vmatprep.subr.mxu0 0.0
  %359 = vmatpush1.msra.mxu0 0.0
  %360 = vmatprep.subr.mxu0 0.0
  %361 = vmatpush1.msra.mxu0 0.0
  %362 = vmatprep.subr.mxu0 0.0
  %363 = vmatpush1.msra.mxu0 0.0
  %364 = vmatprep.subr.mxu0 0.0
  %365 = vmatpush1.msra.mxu0 %v331
  %366 = vmatprep.subr.mxu0 0.0
  %367 = vmatpush1.msra.mxu0 %v330
  %368 = vmatprep.subr.mxu0 0.0
  %369 = vmatpush1.msra.mxu0 %v329
  %370 = vmatprep.subr.mxu0 0.0
  %371 = vmatpush1.msra.mxu0 %v328
  %372 = vmatprep.subr.mxu0 0.0
  %373 = vmatpush2.msra.mxu0 0.0
  %374 = vmatprep.subr.mxu0 0.0
  %375 = vmatpush2.msra.mxu0 0.0
  %376 = vmatprep.subr.mxu0 0.0
  %377 = vmatpush2.msra.mxu0 0.0
  %378 = vmatprep.subr.mxu0 0.0
  %379 = vmatpush2.msra.mxu0 0.0
  %380 = vmatprep.subr.mxu0 0.0
  %381 = vmatpush2.msra.mxu0 0.0
  %382 = vmatprep.subr.mxu0 0.0
  %383 = vmatpush2.msra.mxu0 0.0
  %384 = vmatprep.subr.mxu0 0.0
  %385 = vmatpush2.msra.mxu0 0.0
  %386 = vmatprep.subr.mxu0 0.0
  %387 = vmatpush2.msra.mxu0 0.0
  %388 = vmatprep.subr.mxu0 0.0
  %389 = vmatpush2.msra.mxu0 0.0
  %390 = vmatprep.subr.mxu0 0.0
  %391 = vmatpush2.msra.mxu0 0.0
  %392 = vmatprep.subr.mxu0 0.0
  %393 = vmatpush2.msra.mxu0 0.0
  %394 = vmatprep.subr.mxu0 0.0
  %395 = vmatpush2.msra.mxu0 0.0
  %396 = vmatprep.subr.mxu0 0.0
  %397 = vmatpush2.msra.mxu0 0.0
  %398 = vmatprep.subr.mxu0 0.0
  %399 = vmatpush2.msra.mxu0 0.0
  %400 = vmatprep.subr.mxu0 0.0
  %401 = vmatpush2.msra.mxu0 0.0
  %402 = vmatprep.subr.mxu0 0.0
  %403 = vmatpush2.msra.mxu0 0.0
  %404 = vmatprep.mubr.f32.mxu0 0.0
  %405 = vmatmul.mubr.f32.gmra.mxu0 %v338
  %v406 = vpop.f32.mrf.mxu0
  %v407 = vadd.f32 0.0, %v406
  %v408 = vpop.f32.mrf.mxu0
  %409 = vdwg.mxu0
  %v410 = vadd.f32 %v144, %v407
  %v411 = vxor.u32 %v410, 2147483648
  %v412 = vmul.f32 %v411, 1.442695
  %v413 = vpow.pop %v412
  %v414 = vadd.f32 %v413, 1.0
  %v415 = vrcp.pop %v414
  %v416 = vmul.f32 1.0, %v415
  %v417 = vmul.f32 %v416, 2.0
  %v418 = vsub.f32 %v417, 1.0
  %v419 = vmul.f32 %v416, 0.0
  %421 = vrot.lane.b32.xlu0 %v418, 64
  %v422 = vpop.permute.xlu0 %421
  %v424 = vmul.f32 %v416, %v422
  %426 = vrot.lane.b32.xlu0 %v424, 32
  %v427 = vpop.permute.xlu0 %426
  %v429 = vadd.f32 %v419, %v427
  %v430 = vtanh.pop %v429
  %432 = vrot.lane.b32.xlu0 %v430, 64
  %v433 = vpop.permute.xlu0 %432
  %v435 = vmul.f32 %v416, %v433
  %437 = vrot.lane.b32.xlu0 %v435, 32
  %v438 = vpop.permute.xlu0 %437
  %v439 = vsel %vm336, %v438, 0
  %441 = vmatprep.subr.mxu0 0.0
  %442 = vmatpush1.msra.mxu0 0.0
  %443 = vmatprep.subr.mxu0 0.0
  %444 = vmatpush1.msra.mxu0 0.0
  %445 = vmatprep.subr.mxu0 0.0
  %446 = vmatpush1.msra.mxu0 0.0
  %447 = vmatprep.subr.mxu0 0.0
  %448 = vmatpush1.msra.mxu0 0.0
  %449 = vmatprep.subr.mxu0 0.0
  %450 = vmatpush1.msra.mxu0 0.0
  %451 = vmatprep.subr.mxu0 0.0
  %452 = vmatpush1.msra.mxu0 0.0
  %453 = vmatprep.subr.mxu0 0.0
  %454 = vmatpush1.msra.mxu0 0.0
  %455 = vmatprep.subr.mxu0 0.0
  %456 = vmatpush1.msra.mxu0 0.0
  %457 = vmatprep.subr.mxu0 0.0
  %458 = vmatpush1.msra.mxu0 0.0
  %459 = vmatprep.subr.mxu0 0.0
  %460 = vmatpush1.msra.mxu0 0.0
  %461 = vmatprep.subr.mxu0 0.0
  %462 = vmatpush1.msra.mxu0 0.0
  %463 = vmatprep.subr.mxu0 0.0
  %464 = vmatpush1.msra.mxu0 0.0
  %465 = vmatprep.subr.mxu0 0.0
  %466 = vmatpush1.msra.mxu0 %v331
  %467 = vmatprep.subr.mxu0 0.0
  %468 = vmatpush1.msra.mxu0 %v330
  %469 = vmatprep.subr.mxu0 0.0
  %470 = vmatpush1.msra.mxu0 %v329
  %471 = vmatprep.subr.mxu0 0.0
  %472 = vmatpush1.msra.mxu0 %v328
  %473 = vmatprep.subr.mxu0 0.0
  %474 = vmatpush2.msra.mxu0 0.0
  %475 = vmatprep.subr.mxu0 0.0
  %476 = vmatpush2.msra.mxu0 0.0
  %477 = vmatprep.subr.mxu0 0.0
  %478 = vmatpush2.msra.mxu0 0.0
  %479 = vmatprep.subr.mxu0 0.0
  %480 = vmatpush2.msra.mxu0 0.0
  %481 = vmatprep.subr.mxu0 0.0
  %482 = vmatpush2.msra.mxu0 0.0
  %483 = vmatprep.subr.mxu0 0.0
  %484 = vmatpush2.msra.mxu0 0.0
  %485 = vmatprep.subr.mxu0 0.0
  %486 = vmatpush2.msra.mxu0 0.0
  %487 = vmatprep.subr.mxu0 0.0
  %488 = vmatpush2.msra.mxu0 0.0
  %489 = vmatprep.subr.mxu0 0.0
  %490 = vmatpush2.msra.mxu0 0.0
  %491 = vmatprep.subr.mxu0 0.0
  %492 = vmatpush2.msra.mxu0 0.0
  %493 = vmatprep.subr.mxu0 0.0
  %494 = vmatpush2.msra.mxu0 0.0
  %495 = vmatprep.subr.mxu0 0.0
  %496 = vmatpush2.msra.mxu0 0.0
  %497 = vmatprep.subr.mxu0 0.0
  %498 = vmatpush2.msra.mxu0 0.0
  %499 = vmatprep.subr.mxu0 0.0
  %500 = vmatpush2.msra.mxu0 0.0
  %501 = vmatprep.subr.mxu0 0.0
  %502 = vmatpush2.msra.mxu0 0.0
  %503 = vmatprep.subr.mxu0 0.0
  %504 = vmatpush2.msra.mxu0 0.0
  %505 = vmatprep.mubr.f32.mxu0 0.0
  %506 = vmatmul.mubr.f32.gmra.mxu0 %v439
  %v507 = vpop.f32.mrf.mxu0
  %v508 = vadd.f32 0.0, %v507
  %v509 = vpop.f32.mrf.mxu0
  %510 = vdwg.mxu0
  %v511 = vadd.f32 %v149, %v508
  %v512 = vxor.u32 %v511, 2147483648
  %v513 = vmul.f32 %v512, 1.442695
  %v514 = vpow.pop %v513
  %v515 = vadd.f32 %v514, 1.0
  %v516 = vrcp.pop %v515
  %v517 = vmul.f32 1.0, %v516
  %v518 = vmul.f32 %v517, 2.0
  %v519 = vsub.f32 %v518, 1.0
  %v520 = vmul.f32 %v517, %v429
  %522 = vrot.lane.b32.xlu0 %v519, 64
  %v523 = vpop.permute.xlu0 %522
  %v525 = vmul.f32 %v517, %v523
  %527 = vrot.lane.b32.xlu0 %v525, 32
  %v528 = vpop.permute.xlu0 %527
  %v530 = vadd.f32 %v520, %v528
  %v531 = vtanh.pop %v530
  %533 = vrot.lane.b32.xlu0 %v531, 64
  %v534 = vpop.permute.xlu0 %533
  %v536 = vmul.f32 %v517, %v534
  %538 = vrot.lane.b32.xlu0 %v536, 32
  %v539 = vpop.permute.xlu0 %538
  %v540 = vsel %vm336, %v539, 0
  %542 = vmatprep.subr.mxu0 0.0
  %543 = vmatpush1.msra.mxu0 0.0
  %544 = vmatprep.subr.mxu0 0.0
  %545 = vmatpush1.msra.mxu0 0.0
  %546 = vmatprep.subr.mxu0 0.0
  %547 = vmatpush1.msra.mxu0 0.0
  %548 = vmatprep.subr.mxu0 0.0
  %549 = vmatpush1.msra.mxu0 0.0
  %550 = vmatprep.subr.mxu0 0.0
  %551 = vmatpush1.msra.mxu0 0.0
  %552 = vmatprep.subr.mxu0 0.0
  %553 = vmatpush1.msra.mxu0 0.0
  %554 = vmatprep.subr.mxu0 0.0
  %555 = vmatpush1.msra.mxu0 0.0
  %556 = vmatprep.subr.mxu0 0.0
  %557 = vmatpush1.msra.mxu0 0.0
  %558 = vmatprep.subr.mxu0 0.0
  %559 = vmatpush1.msra.mxu0 0.0
  %560 = vmatprep.subr.mxu0 0.0
  %561 = vmatpush1.msra.mxu0 0.0
  %562 = vmatprep.subr.mxu0 0.0
  %563 = vmatpush1.msra.mxu0 0.0
  %564 = vmatprep.subr.mxu0 0.0
  %565 = vmatpush1.msra.mxu0 0.0
  %566 = vmatprep.subr.mxu0 0.0
  %567 = vmatpush1.msra.mxu0 %v331
  %568 = vmatprep.subr.mxu0 0.0
  %569 = vmatpush1.msra.mxu0 %v330
  %570 = vmatprep.subr.mxu0 0.0
  %571 = vmatpush1.msra.mxu0 %v329
  %572 = vmatprep.subr.mxu0 0.0
  %573 = vmatpush1.msra.mxu0 %v328
  %574 = vmatprep.subr.mxu0 0.0
  %575 = vmatpush2.msra.mxu0 0.0
  %576 = vmatprep.subr.mxu0 0.0
  %577 = vmatpush2.msra.mxu0 0.0
  %578 = vmatprep.subr.mxu0 0.0
  %579 = vmatpush2.msra.mxu0 0.0
  %580 = vmatprep.subr.mxu0 0.0
  %581 = vmatpush2.msra.mxu0 0.0
  %582 = vmatprep.subr.mxu0 0.0
  %583 = vmatpush2.msra.mxu0 0.0
  %584 = vmatprep.subr.mxu0 0.0
  %585 = vmatpush2.msra.mxu0 0.0
  %586 = vmatprep.subr.mxu0 0.0
  %587 = vmatpush2.msra.mxu0 0.0
  %588 = vmatprep.subr.mxu0 0.0
  %589 = vmatpush2.msra.mxu0 0.0
  %590 = vmatprep.subr.mxu0 0.0
  %591 = vmatpush2.msra.mxu0 0.0
  %592 = vmatprep.subr.mxu0 0.0
  %593 = vmatpush2.msra.mxu0 0.0
  %594 = vmatprep.subr.mxu0 0.0
  %595 = vmatpush2.msra.mxu0 0.0
  %596 = vmatprep.subr.mxu0 0.0
  %597 = vmatpush2.msra.mxu0 0.0
  %598 = vmatprep.subr.mxu0 0.0
  %599 = vmatpush2.msra.mxu0 0.0
  %600 = vmatprep.subr.mxu0 0.0
  %601 = vmatpush2.msra.mxu0 0.0
  %602 = vmatprep.subr.mxu0 0.0
  %603 = vmatpush2.msra.mxu0 0.0
  %604 = vmatprep.subr.mxu0 0.0
  %605 = vmatpush2.msra.mxu0 0.0
  %606 = vmatprep.mubr.f32.mxu0 0.0
  %607 = vmatmul.mubr.f32.gmra.mxu0 %v540
  %v608 = vpop.f32.mrf.mxu0
  %v609 = vadd.f32 0.0, %v608
  %v610 = vpop.f32.mrf.mxu0
  %611 = vdwg.mxu0
  %v612 = vadd.f32 %v154, %v609
  %v613 = vxor.u32 %v612, 2147483648
  %v614 = vmul.f32 %v613, 1.442695
  %v615 = vpow.pop %v614
  %v616 = vadd.f32 %v615, 1.0
  %v617 = vrcp.pop %v616
  %v618 = vmul.f32 1.0, %v617
  %v619 = vmul.f32 %v618, 2.0
  %v620 = vsub.f32 %v619, 1.0
  %v621 = vmul.f32 %v618, %v530
  %623 = vrot.lane.b32.xlu0 %v620, 64
  %v624 = vpop.permute.xlu0 %623
  %v626 = vmul.f32 %v618, %v624
  %628 = vrot.lane.b32.xlu0 %v626, 32
  %v629 = vpop.permute.xlu0 %628
  %v631 = vadd.f32 %v621, %v629
  %v632 = vtanh.pop %v631
  %634 = vrot.lane.b32.xlu0 %v632, 64
  %v635 = vpop.permute.xlu0 %634
  %v637 = vmul.f32 %v618, %v635
  %639 = vrot.lane.b32.xlu0 %v637, 32
  %v640 = vpop.permute.xlu0 %639
  %v641 = vsel %vm336, %v640, 0
  %643 = vmatprep.subr.mxu0 0.0
  %644 = vmatpush1.msra.mxu0 0.0
  %645 = vmatprep.subr.mxu0 0.0
  %646 = vmatpush1.msra.mxu0 0.0
  %647 = vmatprep.subr.mxu0 0.0
  %648 = vmatpush1.msra.mxu0 0.0
  %649 = vmatprep.subr.mxu0 0.0
  %650 = vmatpush1.msra.mxu0 0.0
  %651 = vmatprep.subr.mxu0 0.0
  %652 = vmatpush1.msra.mxu0 0.0
  %653 = vmatprep.subr.mxu0 0.0
  %654 = vmatpush1.msra.mxu0 0.0
  %655 = vmatprep.subr.mxu0 0.0
  %656 = vmatpush1.msra.mxu0 0.0
  %657 = vmatprep.subr.mxu0 0.0
  %658 = vmatpush1.msra.mxu0 0.0
  %659 = vmatprep.subr.mxu0 0.0
  %660 = vmatpush1.msra.mxu0 0.0
  %661 = vmatprep.subr.mxu0 0.0
  %662 = vmatpush1.msra.mxu0 0.0
  %663 = vmatprep.subr.mxu0 0.0
  %664 = vmatpush1.msra.mxu0 0.0
  %665 = vmatprep.subr.mxu0 0.0
  %666 = vmatpush1.msra.mxu0 0.0
  %667 = vmatprep.subr.mxu0 0.0
  %668 = vmatpush1.msra.mxu0 %v331
  %669 = vmatprep.subr.mxu0 0.0
  %670 = vmatpush1.msra.mxu0 %v330
  %671 = vmatprep.subr.mxu0 0.0
  %672 = vmatpush1.msra.mxu0 %v329
  %673 = vmatprep.subr.mxu0 0.0
  %674 = vmatpush1.msra.mxu0 %v328
  %675 = vmatprep.subr.mxu0 0.0
  %676 = vmatpush2.msra.mxu0 0.0
  %677 = vmatprep.subr.mxu0 0.0
  %678 = vmatpush2.msra.mxu0 0.0
  %679 = vmatprep.subr.mxu0 0.0
  %680 = vmatpush2.msra.mxu0 0.0
  %681 = vmatprep.subr.mxu0 0.0
  %682 = vmatpush2.msra.mxu0 0.0
  %683 = vmatprep.subr.mxu0 0.0
  %684 = vmatpush2.msra.mxu0 0.0
  %685 = vmatprep.subr.mxu0 0.0
  %686 = vmatpush2.msra.mxu0 0.0
  %687 = vmatprep.subr.mxu0 0.0
  %688 = vmatpush2.msra.mxu0 0.0
  %689 = vmatprep.subr.mxu0 0.0
  %690 = vmatpush2.msra.mxu0 0.0
  %691 = vmatprep.subr.mxu0 0.0
  %692 = vmatpush2.msra.mxu0 0.0
  %693 = vmatprep.subr.mxu0 0.0
  %694 = vmatpush2.msra.mxu0 0.0
  %695 = vmatprep.subr.mxu0 0.0
  %696 = vmatpush2.msra.mxu0 0.0
  %697 = vmatprep.subr.mxu0 0.0
  %698 = vmatpush2.msra.mxu0 0.0
  %699 = vmatprep.subr.mxu0 0.0
  %700 = vmatpush2.msra.mxu0 0.0
  %701 = vmatprep.subr.mxu0 0.0
  %702 = vmatpush2.msra.mxu0 0.0
  %703 = vmatprep.subr.mxu0 0.0
  %704 = vmatpush2.msra.mxu0 0.0
  %705 = vmatprep.subr.mxu0 0.0
  %706 = vmatpush2.msra.mxu0 0.0
  %707 = vmatprep.mubr.f32.mxu0 0.0
  %708 = vmatmul.mubr.f32.gmra.mxu0 %v641
  %v709 = vpop.f32.mrf.mxu0
  %v710 = vadd.f32 0.0, %v709
  %v711 = vpop.f32.mrf.mxu0
  %712 = vdwg.mxu0
  %v713 = vadd.f32 %v159, %v710
  %v714 = vxor.u32 %v713, 2147483648
  %v715 = vmul.f32 %v714, 1.442695
  %v716 = vpow.pop %v715
  %v717 = vadd.f32 %v716, 1.0
  %v718 = vrcp.pop %v717
  %v719 = vmul.f32 1.0, %v718
  %v720 = vmul.f32 %v719, 2.0
  %v721 = vsub.f32 %v720, 1.0
  %v722 = vmul.f32 %v719, %v631
  %724 = vrot.lane.b32.xlu0 %v721, 64
  %v725 = vpop.permute.xlu0 %724
  %v727 = vmul.f32 %v719, %v725
  %729 = vrot.lane.b32.xlu0 %v727, 32
  %v730 = vpop.permute.xlu0 %729
  %v732 = vadd.f32 %v722, %v730
  %v733 = vtanh.pop %v732
  %735 = vrot.lane.b32.xlu0 %v733, 64
  %v736 = vpop.permute.xlu0 %735
  %v738 = vmul.f32 %v719, %v736
  %740 = vrot.lane.b32.xlu0 %v738, 32
  %v741 = vpop.permute.xlu0 %740
  %v742 = vsel %vm336, %v741, 0
  %744 = vmatprep.subr.mxu0 0.0
  %745 = vmatpush1.msra.mxu0 0.0
  %746 = vmatprep.subr.mxu0 0.0
  %747 = vmatpush1.msra.mxu0 0.0
  %748 = vmatprep.subr.mxu0 0.0
  %749 = vmatpush1.msra.mxu0 0.0
  %750 = vmatprep.subr.mxu0 0.0
  %751 = vmatpush1.msra.mxu0 0.0
  %752 = vmatprep.subr.mxu0 0.0
  %753 = vmatpush1.msra.mxu0 0.0
  %754 = vmatprep.subr.mxu0 0.0
  %755 = vmatpush1.msra.mxu0 0.0
  %756 = vmatprep.subr.mxu0 0.0
  %757 = vmatpush1.msra.mxu0 0.0
  %758 = vmatprep.subr.mxu0 0.0
  %759 = vmatpush1.msra.mxu0 0.0
  %760 = vmatprep.subr.mxu0 0.0
  %761 = vmatpush1.msra.mxu0 0.0
  %762 = vmatprep.subr.mxu0 0.0
  %763 = vmatpush1.msra.mxu0 0.0
  %764 = vmatprep.subr.mxu0 0.0
  %765 = vmatpush1.msra.mxu0 0.0
  %766 = vmatprep.subr.mxu0 0.0
  %767 = vmatpush1.msra.mxu0 0.0
  %768 = vmatprep.subr.mxu0 0.0
  %769 = vmatpush1.msra.mxu0 %v331
  %770 = vmatprep.subr.mxu0 0.0
  %771 = vmatpush1.msra.mxu0 %v330
  %772 = vmatprep.subr.mxu0 0.0
  %773 = vmatpush1.msra.mxu0 %v329
  %774 = vmatprep.subr.mxu0 0.0
  %775 = vmatpush1.msra.mxu0 %v328
  %776 = vmatprep.subr.mxu0 0.0
  %777 = vmatpush2.msra.mxu0 0.0
  %778 = vmatprep.subr.mxu0 0.0
  %779 = vmatpush2.msra.mxu0 0.0
  %780 = vmatprep.subr.mxu0 0.0
  %781 = vmatpush2.msra.mxu0 0.0
  %782 = vmatprep.subr.mxu0 0.0
  %783 = vmatpush2.msra.mxu0 0.0
  %784 = vmatprep.subr.mxu0 0.0
  %785 = vmatpush2.msra.mxu0 0.0
  %786 = vmatprep.subr.mxu0 0.0
  %787 = vmatpush2.msra.mxu0 0.0
  %788 = vmatprep.subr.mxu0 0.0
  %789 = vmatpush2.msra.mxu0 0.0
  %790 = vmatprep.subr.mxu0 0.0
  %791 = vmatpush2.msra.mxu0 0.0
  %792 = vmatprep.subr.mxu0 0.0
  %793 = vmatpush2.msra.mxu0 0.0
  %794 = vmatprep.subr.mxu0 0.0
  %795 = vmatpush2.msra.mxu0 0.0
  %796 = vmatprep.subr.mxu0 0.0
  %797 = vmatpush2.msra.mxu0 0.0
  %798 = vmatprep.subr.mxu0 0.0
  %799 = vmatpush2.msra.mxu0 0.0
  %800 = vmatprep.subr.mxu0 0.0
  %801 = vmatpush2.msra.mxu0 0.0
  %802 = vmatprep.subr.mxu0 0.0
  %803 = vmatpush2.msra.mxu0 0.0
  %804 = vmatprep.subr.mxu0 0.0
  %805 = vmatpush2.msra.mxu0 0.0
  %806 = vmatprep.subr.mxu0 0.0
  %807 = vmatpush2.msra.mxu0 0.0
  %808 = vmatprep.mubr.f32.mxu0 0.0
  %809 = vmatmul.mubr.f32.gmra.mxu0 %v742
  %v810 = vpop.f32.mrf.mxu0
  %v811 = vadd.f32 0.0, %v810
  %v812 = vpop.f32.mrf.mxu0
  %813 = vdwg.mxu0
  %v814 = vadd.f32 %v164, %v811
  %v815 = vxor.u32 %v814, 2147483648
  %v816 = vmul.f32 %v815, 1.442695
  %v817 = vpow.pop %v816
  %v818 = vadd.f32 %v817, 1.0
  %v819 = vrcp.pop %v818
  %v820 = vmul.f32 1.0, %v819
  %v821 = vmul.f32 %v820, 2.0
  %v822 = vsub.f32 %v821, 1.0
  %v823 = vmul.f32 %v820, %v732
  %825 = vrot.lane.b32.xlu0 %v822, 64
  %v826 = vpop.permute.xlu0 %825
  %v828 = vmul.f32 %v820, %v826
  %830 = vrot.lane.b32.xlu0 %v828, 32
  %v831 = vpop.permute.xlu0 %830
  %v833 = vadd.f32 %v823, %v831
  %v834 = vtanh.pop %v833
  %836 = vrot.lane.b32.xlu0 %v834, 64
  %v837 = vpop.permute.xlu0 %836
  %v839 = vmul.f32 %v820, %v837
  %841 = vrot.lane.b32.xlu0 %v839, 32
  %v842 = vpop.permute.xlu0 %841
  %v843 = vsel %vm336, %v842, 0
  %845 = vmatprep.subr.mxu0 0.0
  %846 = vmatpush1.msra.mxu0 0.0
  %847 = vmatprep.subr.mxu0 0.0
  %848 = vmatpush1.msra.mxu0 0.0
  %849 = vmatprep.subr.mxu0 0.0
  %850 = vmatpush1.msra.mxu0 0.0
  %851 = vmatprep.subr.mxu0 0.0
  %852 = vmatpush1.msra.mxu0 0.0
  %853 = vmatprep.subr.mxu0 0.0
  %854 = vmatpush1.msra.mxu0 0.0
  %855 = vmatprep.subr.mxu0 0.0
  %856 = vmatpush1.msra.mxu0 0.0
  %857 = vmatprep.subr.mxu0 0.0
  %858 = vmatpush1.msra.mxu0 0.0
  %859 = vmatprep.subr.mxu0 0.0
  %860 = vmatpush1.msra.mxu0 0.0
  %861 = vmatprep.subr.mxu0 0.0
  %862 = vmatpush1.msra.mxu0 0.0
  %863 = vmatprep.subr.mxu0 0.0
  %864 = vmatpush1.msra.mxu0 0.0
  %865 = vmatprep.subr.mxu0 0.0
  %866 = vmatpush1.msra.mxu0 0.0
  %867 = vmatprep.subr.mxu0 0.0
  %868 = vmatpush1.msra.mxu0 0.0
  %869 = vmatprep.subr.mxu0 0.0
  %870 = vmatpush1.msra.mxu0 %v331
  %871 = vmatprep.subr.mxu0 0.0
  %872 = vmatpush1.msra.mxu0 %v330
  %873 = vmatprep.subr.mxu0 0.0
  %874 = vmatpush1.msra.mxu0 %v329
  %875 = vmatprep.subr.mxu0 0.0
  %876 = vmatpush1.msra.mxu0 %v328
  %877 = vmatprep.subr.mxu0 0.0
  %878 = vmatpush2.msra.mxu0 0.0
  %879 = vmatprep.subr.mxu0 0.0
  %880 = vmatpush2.msra.mxu0 0.0
  %881 = vmatprep.subr.mxu0 0.0
  %882 = vmatpush2.msra.mxu0 0.0
  %883 = vmatprep.subr.mxu0 0.0
  %884 = vmatpush2.msra.mxu0 0.0
  %885 = vmatprep.subr.mxu0 0.0
  %886 = vmatpush2.msra.mxu0 0.0
  %887 = vmatprep.subr.mxu0 0.0
  %888 = vmatpush2.msra.mxu0 0.0
  %889 = vmatprep.subr.mxu0 0.0
  %890 = vmatpush2.msra.mxu0 0.0
  %891 = vmatprep.subr.mxu0 0.0
  %892 = vmatpush2.msra.mxu0 0.0
  %893 = vmatprep.subr.mxu0 0.0
  %894 = vmatpush2.msra.mxu0 0.0
  %895 = vmatprep.subr.mxu0 0.0
  %896 = vmatpush2.msra.mxu0 0.0
  %897 = vmatprep.subr.mxu0 0.0
  %898 = vmatpush2.msra.mxu0 0.0
  %899 = vmatprep.subr.mxu0 0.0
  %900 = vmatpush2.msra.mxu0 0.0
  %901 = vmatprep.subr.mxu0 0.0
  %902 = vmatpush2.msra.mxu0 0.0
  %903 = vmatprep.subr.mxu0 0.0
  %904 = vmatpush2.msra.mxu0 0.0
  %905 = vmatprep.subr.mxu0 0.0
  %906 = vmatpush2.msra.mxu0 0.0
  %907 = vmatprep.subr.mxu0 0.0
  %908 = vmatpush2.msra.mxu0 0.0
  %909 = vmatprep.mubr.f32.mxu0 0.0
  %910 = vmatmul.mubr.f32.gmra.mxu0 %v843
  %v911 = vpop.f32.mrf.mxu0
  %v912 = vadd.f32 0.0, %v911
  %v913 = vpop.f32.mrf.mxu0
  %914 = vdwg.mxu0
  %v915 = vadd.f32 %v169, %v912
  %v916 = vxor.u32 %v915, 2147483648
  %v917 = vmul.f32 %v916, 1.442695
  %v918 = vpow.pop %v917
  %v919 = vadd.f32 %v918, 1.0
  %v920 = vrcp.pop %v919
  %v921 = vmul.f32 1.0, %v920
  %v922 = vmul.f32 %v921, 2.0
  %v923 = vsub.f32 %v922, 1.0
  %v924 = vmul.f32 %v921, %v833
  %926 = vrot.lane.b32.xlu0 %v923, 64
  %v927 = vpop.permute.xlu0 %926
  %v929 = vmul.f32 %v921, %v927
  %931 = vrot.lane.b32.xlu0 %v929, 32
  %v932 = vpop.permute.xlu0 %931
  %v934 = vadd.f32 %v924, %v932
  %v935 = vtanh.pop %v934
  %937 = vrot.lane.b32.xlu0 %v935, 64
  %v938 = vpop.permute.xlu0 %937
  %v940 = vmul.f32 %v921, %v938
  %942 = vrot.lane.b32.xlu0 %v940, 32
  %v943 = vpop.permute.xlu0 %942
  %v944 = vsel %vm336, %v943, 0
  %946 = vmatprep.subr.mxu0 0.0
  %947 = vmatpush1.msra.mxu0 0.0
  %948 = vmatprep.subr.mxu0 0.0
  %949 = vmatpush1.msra.mxu0 0.0
  %950 = vmatprep.subr.mxu0 0.0
  %951 = vmatpush1.msra.mxu0 0.0
  %952 = vmatprep.subr.mxu0 0.0
  %953 = vmatpush1.msra.mxu0 0.0
  %954 = vmatprep.subr.mxu0 0.0
  %955 = vmatpush1.msra.mxu0 0.0
  %956 = vmatprep.subr.mxu0 0.0
  %957 = vmatpush1.msra.mxu0 0.0
  %958 = vmatprep.subr.mxu0 0.0
  %959 = vmatpush1.msra.mxu0 0.0
  %960 = vmatprep.subr.mxu0 0.0
  %961 = vmatpush1.msra.mxu0 0.0
  %962 = vmatprep.subr.mxu0 0.0
  %963 = vmatpush1.msra.mxu0 0.0
  %964 = vmatprep.subr.mxu0 0.0
  %965 = vmatpush1.msra.mxu0 0.0
  %966 = vmatprep.subr.mxu0 0.0
  %967 = vmatpush1.msra.mxu0 0.0
  %968 = vmatprep.subr.mxu0 0.0
  %969 = vmatpush1.msra.mxu0 0.0
  %970 = vmatprep.subr.mxu0 0.0
  %971 = vmatpush1.msra.mxu0 %v331
  %972 = vmatprep.subr.mxu0 0.0
  %973 = vmatpush1.msra.mxu0 %v330
  %974 = vmatprep.subr.mxu0 0.0
  %975 = vmatpush1.msra.mxu0 %v329
  %976 = vmatprep.subr.mxu0 0.0
  %977 = vmatpush1.msra.mxu0 %v328
  %978 = vmatprep.subr.mxu0 0.0
  %979 = vmatpush2.msra.mxu0 0.0
  %980 = vmatprep.subr.mxu0 0.0
  %981 = vmatpush2.msra.mxu0 0.0
  %982 = vmatprep.subr.mxu0 0.0
  %983 = vmatpush2.msra.mxu0 0.0
  %984 = vmatprep.subr.mxu0 0.0
  %985 = vmatpush2.msra.mxu0 0.0
  %986 = vmatprep.subr.mxu0 0.0
  %987 = vmatpush2.msra.mxu0 0.0
  %988 = vmatprep.subr.mxu0 0.0
  %989 = vmatpush2.msra.mxu0 0.0
  %990 = vmatprep.subr.mxu0 0.0
  %991 = vmatpush2.msra.mxu0 0.0
  %992 = vmatprep.subr.mxu0 0.0
  %993 = vmatpush2.msra.mxu0 0.0
  %994 = vmatprep.subr.mxu0 0.0
  %995 = vmatpush2.msra.mxu0 0.0
  %996 = vmatprep.subr.mxu0 0.0
  %997 = vmatpush2.msra.mxu0 0.0
  %998 = vmatprep.subr.mxu0 0.0
  %999 = vmatpush2.msra.mxu0 0.0
  %1000 = vmatprep.subr.mxu0 0.0
  %1001 = vmatpush2.msra.mxu0 0.0
  %1002 = vmatprep.subr.mxu0 0.0
  %1003 = vmatpush2.msra.mxu0 0.0
  %1004 = vmatprep.subr.mxu0 0.0
  %1005 = vmatpush2.msra.mxu0 0.0
  %1006 = vmatprep.subr.mxu0 0.0
  %1007 = vmatpush2.msra.mxu0 0.0
  %1008 = vmatprep.subr.mxu0 0.0
  %1009 = vmatpush2.msra.mxu0 0.0
  %1010 = vmatprep.mubr.f32.mxu0 0.0
  %1011 = vmatmul.mubr.f32.gmra.mxu0 %v944
  %v1012 = vpop.f32.mrf.mxu0
  %v1013 = vadd.f32 0.0, %v1012
  %v1014 = vpop.f32.mrf.mxu0
  %1015 = vdwg.mxu0
  %v1016 = vadd.f32 %v174, %v1013
  %v1017 = vxor.u32 %v1016, 2147483648
  %v1018 = vmul.f32 %v1017, 1.442695
  %v1019 = vpow.pop %v1018
  %v1020 = vadd.f32 %v1019, 1.0
  %v1021 = vrcp.pop %v1020
  %v1022 = vmul.f32 1.0, %v1021
  %v1023 = vmul.f32 %v1022, 2.0
  %v1024 = vsub.f32 %v1023, 1.0
  %v1025 = vmul.f32 %v1022, %v934
  %1027 = vrot.lane.b32.xlu0 %v1024, 64
  %v1028 = vpop.permute.xlu0 %1027
  %v1030 = vmul.f32 %v1022, %v1028
  %1032 = vrot.lane.b32.xlu0 %v1030, 32
  %v1033 = vpop.permute.xlu0 %1032
  %v1035 = vadd.f32 %v1025, %v1033
  %v1036 = vtanh.pop %v1035
  %1038 = vrot.lane.b32.xlu0 %v1036, 64
  %v1039 = vpop.permute.xlu0 %1038
  %v1041 = vmul.f32 %v1022, %v1039
  %1043 = vrot.lane.b32.xlu0 %v1041, 32
  %v1044 = vpop.permute.xlu0 %1043
  %v1045 = vsel %vm336, %v1044, 0
  %1047 = vmatprep.subr.mxu0 0.0
  %1048 = vmatpush1.msra.mxu0 0.0
  %1049 = vmatprep.subr.mxu0 0.0
  %1050 = vmatpush1.msra.mxu0 0.0
  %1051 = vmatprep.subr.mxu0 0.0
  %1052 = vmatpush1.msra.mxu0 0.0
  %1053 = vmatprep.subr.mxu0 0.0
  %1054 = vmatpush1.msra.mxu0 0.0
  %1055 = vmatprep.subr.mxu0 0.0
  %1056 = vmatpush1.msra.mxu0 0.0
  %1057 = vmatprep.subr.mxu0 0.0
  %1058 = vmatpush1.msra.mxu0 0.0
  %1059 = vmatprep.subr.mxu0 0.0
  %1060 = vmatpush1.msra.mxu0 0.0
  %1061 = vmatprep.subr.mxu0 0.0
  %1062 = vmatpush1.msra.mxu0 0.0
  %1063 = vmatprep.subr.mxu0 0.0
  %1064 = vmatpush1.msra.mxu0 0.0
  %1065 = vmatprep.subr.mxu0 0.0
  %1066 = vmatpush1.msra.mxu0 0.0
  %1067 = vmatprep.subr.mxu0 0.0
  %1068 = vmatpush1.msra.mxu0 0.0
  %1069 = vmatprep.subr.mxu0 0.0
  %1070 = vmatpush1.msra.mxu0 0.0
  %1071 = vmatprep.subr.mxu0 0.0
  %1072 = vmatpush1.msra.mxu0 %v331
  %1073 = vmatprep.subr.mxu0 0.0
  %1074 = vmatpush1.msra.mxu0 %v330
  %1075 = vmatprep.subr.mxu0 0.0
  %1076 = vmatpush1.msra.mxu0 %v329
  %1077 = vmatprep.subr.mxu0 0.0
  %1078 = vmatpush1.msra.mxu0 %v328
  %1079 = vmatprep.subr.mxu0 0.0
  %1080 = vmatpush2.msra.mxu0 0.0
  %1081 = vmatprep.subr.mxu0 0.0
  %1082 = vmatpush2.msra.mxu0 0.0
  %1083 = vmatprep.subr.mxu0 0.0
  %1084 = vmatpush2.msra.mxu0 0.0
  %1085 = vmatprep.subr.mxu0 0.0
  %1086 = vmatpush2.msra.mxu0 0.0
  %1087 = vmatprep.subr.mxu0 0.0
  %1088 = vmatpush2.msra.mxu0 0.0
  %1089 = vmatprep.subr.mxu0 0.0
  %1090 = vmatpush2.msra.mxu0 0.0
  %1091 = vmatprep.subr.mxu0 0.0
  %1092 = vmatpush2.msra.mxu0 0.0
  %1093 = vmatprep.subr.mxu0 0.0
  %1094 = vmatpush2.msra.mxu0 0.0
  %1095 = vmatprep.subr.mxu0 0.0
  %1096 = vmatpush2.msra.mxu0 0.0
  %1097 = vmatprep.subr.mxu0 0.0
  %1098 = vmatpush2.msra.mxu0 0.0
  %1099 = vmatprep.subr.mxu0 0.0
  %1100 = vmatpush2.msra.mxu0 0.0
  %1101 = vmatprep.subr.mxu0 0.0
  %1102 = vmatpush2.msra.mxu0 0.0
  %1103 = vmatprep.subr.mxu0 0.0
  %1104 = vmatpush2.msra.mxu0 0.0
  %1105 = vmatprep.subr.mxu0 0.0
  %1106 = vmatpush2.msra.mxu0 0.0
  %1107 = vmatprep.subr.mxu0 0.0
  %1108 = vmatpush2.msra.mxu0 0.0
  %1109 = vmatprep.subr.mxu0 0.0
  %1110 = vmatpush2.msra.mxu0 0.0
  %1111 = vmatprep.mubr.f32.mxu0 0.0
  %1112 = vmatmul.mubr.f32.gmra.mxu0 %v1045
  %v1113 = vpop.f32.mrf.mxu0
  %v1114 = vadd.f32 0.0, %v1113
  %v1115 = vpop.f32.mrf.mxu0
  %1116 = vdwg.mxu0
  %v1117 = vadd.f32 %v179, %v1114
  %v1118 = vxor.u32 %v1117, 2147483648
  %v1119 = vmul.f32 %v1118, 1.442695
  %v1120 = vpow.pop %v1119
  %v1121 = vadd.f32 %v1120, 1.0
  %v1122 = vrcp.pop %v1121
  %v1123 = vmul.f32 1.0, %v1122
  %v1124 = vmul.f32 %v1123, 2.0
  %v1125 = vsub.f32 %v1124, 1.0
  %v1126 = vmul.f32 %v1123, %v1035
  %1128 = vrot.lane.b32.xlu0 %v1125, 64
  %v1129 = vpop.permute.xlu0 %1128
  %v1131 = vmul.f32 %v1123, %v1129
  %1133 = vrot.lane.b32.xlu0 %v1131, 32
  %v1134 = vpop.permute.xlu0 %1133
  %v1136 = vadd.f32 %v1126, %v1134
  %v1137 = vtanh.pop %v1136
  %1139 = vrot.lane.b32.xlu0 %v1137, 64
  %v1140 = vpop.permute.xlu0 %1139
  %v1142 = vmul.f32 %v1123, %v1140
  %1144 = vrot.lane.b32.xlu0 %v1142, 32
  %v1145 = vpop.permute.xlu0 %1144
  %v1146 = vsel %vm336, %v1145, 0
  %1148 = vmatprep.subr.mxu0 0.0
  %1149 = vmatpush1.msra.mxu0 0.0
  %1150 = vmatprep.subr.mxu0 0.0
  %1151 = vmatpush1.msra.mxu0 0.0
  %1152 = vmatprep.subr.mxu0 0.0
  %1153 = vmatpush1.msra.mxu0 0.0
  %1154 = vmatprep.subr.mxu0 0.0
  %1155 = vmatpush1.msra.mxu0 0.0
  %1156 = vmatprep.subr.mxu0 0.0
  %1157 = vmatpush1.msra.mxu0 0.0
  %1158 = vmatprep.subr.mxu0 0.0
  %1159 = vmatpush1.msra.mxu0 0.0
  %1160 = vmatprep.subr.mxu0 0.0
  %1161 = vmatpush1.msra.mxu0 0.0
  %1162 = vmatprep.subr.mxu0 0.0
  %1163 = vmatpush1.msra.mxu0 0.0
  %1164 = vmatprep.subr.mxu0 0.0
  %1165 = vmatpush1.msra.mxu0 0.0
  %1166 = vmatprep.subr.mxu0 0.0
  %1167 = vmatpush1.msra.mxu0 0.0
  %1168 = vmatprep.subr.mxu0 0.0
  %1169 = vmatpush1.msra.mxu0 0.0
  %1170 = vmatprep.subr.mxu0 0.0
  %1171 = vmatpush1.msra.mxu0 0.0
  %1172 = vmatprep.subr.mxu0 0.0
  %1173 = vmatpush1.msra.mxu0 %v335
  %1174 = vmatprep.subr.mxu0 0.0
  %1175 = vmatpush1.msra.mxu0 %v334
  %1176 = vmatprep.subr.mxu0 0.0
  %1177 = vmatpush1.msra.mxu0 %v333
  %1178 = vmatprep.subr.mxu0 0.0
  %1179 = vmatpush1.msra.mxu0 %v332
  %1180 = vmatprep.subr.mxu0 0.0
  %1181 = vmatpush2.msra.mxu0 0.0
  %1182 = vmatprep.subr.mxu0 0.0
  %1183 = vmatpush2.msra.mxu0 0.0
  %1184 = vmatprep.subr.mxu0 0.0
  %1185 = vmatpush2.msra.mxu0 0.0
  %1186 = vmatprep.subr.mxu0 0.0
  %1187 = vmatpush2.msra.mxu0 0.0
  %1188 = vmatprep.subr.mxu0 0.0
  %1189 = vmatpush2.msra.mxu0 0.0
  %1190 = vmatprep.subr.mxu0 0.0
  %1191 = vmatpush2.msra.mxu0 0.0
  %1192 = vmatprep.subr.mxu0 0.0
  %1193 = vmatpush2.msra.mxu0 0.0
  %1194 = vmatprep.subr.mxu0 0.0
  %1195 = vmatpush2.msra.mxu0 0.0
  %1196 = vmatprep.subr.mxu0 0.0
  %1197 = vmatpush2.msra.mxu0 0.0
  %1198 = vmatprep.subr.mxu0 0.0
  %1199 = vmatpush2.msra.mxu0 0.0
  %1200 = vmatprep.subr.mxu0 0.0
  %1201 = vmatpush2.msra.mxu0 0.0
  %1202 = vmatprep.subr.mxu0 0.0
  %1203 = vmatpush2.msra.mxu0 0.0
  %1204 = vmatprep.subr.mxu0 0.0
  %1205 = vmatpush2.msra.mxu0 0.0
  %1206 = vmatprep.subr.mxu0 0.0
  %1207 = vmatpush2.msra.mxu0 0.0
  %1208 = vmatprep.subr.mxu0 0.0
  %1209 = vmatpush2.msra.mxu0 0.0
  %1210 = vmatprep.subr.mxu0 0.0
  %1211 = vmatpush2.msra.mxu0 0.0
  %1212 = vmatprep.mubr.f32.mxu0 0.0
  %1213 = vmatmul.mubr.f32.gmra.mxu0 %v1146
  %v1214 = vpop.f32.mrf.mxu0
  %v1215 = vadd.f32 0.0, %v1214
  %v1216 = vpop.f32.mrf.mxu0
  %1217 = vdwg.mxu0
  %v1218 = vadd.f32 %v290, %v1215
  %v1219 = vxor.u32 %v1218, 2147483648
  %v1220 = vmul.f32 %v1219, 1.442695
  %v1221 = vpow.pop %v1220
  %v1222 = vadd.f32 %v1221, 1.0
  %v1223 = vrcp.pop %v1222
  %v1224 = vmul.f32 1.0, %v1223
  %v1225 = vmul.f32 %v1224, 2.0
  %v1226 = vsub.f32 %v1225, 1.0
  %v1227 = vmul.f32 %v1224, %v1136
  %1229 = vrot.lane.b32.xlu0 %v1226, 64
  %v1230 = vpop.permute.xlu0 %1229
  %v1232 = vmul.f32 %v1224, %v1230
  %1234 = vrot.lane.b32.xlu0 %v1232, 32
  %v1235 = vpop.permute.xlu0 %1234
  %v1237 = vadd.f32 %v1227, %v1235
  %v1238 = vtanh.pop %v1237
  %1240 = vrot.lane.b32.xlu0 %v1238, 64
  %v1241 = vpop.permute.xlu0 %1240
  %v1243 = vmul.f32 %v1224, %v1241
  %1245 = vrot.lane.b32.xlu0 %v1243, 32
  %v1246 = vpop.permute.xlu0 %1245
  %1248 = vst.msk [vmem:[#allocation2] sm:$0xff] %vm336, %v1246
  %v1249 = vsel %vm336, %v1246, 0
  %1251 = vmatprep.subr.mxu0 0.0
  %1252 = vmatpush1.msra.mxu0 0.0
  %1253 = vmatprep.subr.mxu0 0.0
  %1254 = vmatpush1.msra.mxu0 0.0
  %1255 = vmatprep.subr.mxu0 0.0
  %1256 = vmatpush1.msra.mxu0 0.0
  %1257 = vmatprep.subr.mxu0 0.0
  %1258 = vmatpush1.msra.mxu0 0.0
  %1259 = vmatprep.subr.mxu0 0.0
  %1260 = vmatpush1.msra.mxu0 0.0
  %1261 = vmatprep.subr.mxu0 0.0
  %1262 = vmatpush1.msra.mxu0 0.0
  %1263 = vmatprep.subr.mxu0 0.0
  %1264 = vmatpush1.msra.mxu0 0.0
  %1265 = vmatprep.subr.mxu0 0.0
  %1266 = vmatpush1.msra.mxu0 0.0
  %1267 = vmatprep.subr.mxu0 0.0
  %1268 = vmatpush1.msra.mxu0 0.0
  %1269 = vmatprep.subr.mxu0 0.0
  %1270 = vmatpush1.msra.mxu0 0.0
  %1271 = vmatprep.subr.mxu0 0.0
  %1272 = vmatpush1.msra.mxu0 0.0
  %1273 = vmatprep.subr.mxu0 0.0
  %1274 = vmatpush1.msra.mxu0 0.0
  %1275 = vmatprep.subr.mxu0 0.0
  %1276 = vmatpush1.msra.mxu0 %v335
  %1277 = vmatprep.subr.mxu0 0.0
  %1278 = vmatpush1.msra.mxu0 %v334
  %1279 = vmatprep.subr.mxu0 0.0
  %1280 = vmatpush1.msra.mxu0 %v333
  %1281 = vmatprep.subr.mxu0 0.0
  %1282 = vmatpush1.msra.mxu0 %v332
  %1283 = vmatprep.subr.mxu0 0.0
  %1284 = vmatpush2.msra.mxu0 0.0
  %1285 = vmatprep.subr.mxu0 0.0
  %1286 = vmatpush2.msra.mxu0 0.0
  %1287 = vmatprep.subr.mxu0 0.0
  %1288 = vmatpush2.msra.mxu0 0.0
  %1289 = vmatprep.subr.mxu0 0.0
  %1290 = vmatpush2.msra.mxu0 0.0
  %1291 = vmatprep.subr.mxu0 0.0
  %1292 = vmatpush2.msra.mxu0 0.0
  %1293 = vmatprep.subr.mxu0 0.0
  %1294 = vmatpush2.msra.mxu0 0.0
  %1295 = vmatprep.subr.mxu0 0.0
  %1296 = vmatpush2.msra.mxu0 0.0
  %1297 = vmatprep.subr.mxu0 0.0
  %1298 = vmatpush2.msra.mxu0 0.0
  %1299 = vmatprep.subr.mxu0 0.0
  %1300 = vmatpush2.msra.mxu0 0.0
  %1301 = vmatprep.subr.mxu0 0.0
  %1302 = vmatpush2.msra.mxu0 0.0
  %1303 = vmatprep.subr.mxu0 0.0
  %1304 = vmatpush2.msra.mxu0 0.0
  %1305 = vmatprep.subr.mxu0 0.0
  %1306 = vmatpush2.msra.mxu0 0.0
  %1307 = vmatprep.subr.mxu0 0.0
  %1308 = vmatpush2.msra.mxu0 0.0
  %1309 = vmatprep.subr.mxu0 0.0
  %1310 = vmatpush2.msra.mxu0 0.0
  %1311 = vmatprep.subr.mxu0 0.0
  %1312 = vmatpush2.msra.mxu0 0.0
  %1313 = vmatprep.subr.mxu0 0.0
  %1314 = vmatpush2.msra.mxu0 0.0
  %1315 = vmatprep.mubr.f32.mxu0 0.0
  %1316 = vmatmul.mubr.f32.gmra.mxu0 %v1249
  %v1317 = vpop.f32.mrf.mxu0
  %v1318 = vadd.f32 0.0, %v1317
  %v1319 = vpop.f32.mrf.mxu0
  %1320 = vdwg.mxu0
  %v1321 = vadd.f32 %v295, %v1318
  %v1322 = vxor.u32 %v1321, 2147483648
  %v1323 = vmul.f32 %v1322, 1.442695
  %v1324 = vpow.pop %v1323
  %v1325 = vadd.f32 %v1324, 1.0
  %v1326 = vrcp.pop %v1325
  %v1327 = vmul.f32 1.0, %v1326
  %v1328 = vmul.f32 %v1327, 2.0
  %v1329 = vsub.f32 %v1328, 1.0
  %v1330 = vmul.f32 %v1327, %v1237
  %1332 = vrot.lane.b32.xlu0 %v1329, 64
  %v1333 = vpop.permute.xlu0 %1332
  %v1335 = vmul.f32 %v1327, %v1333
  %1337 = vrot.lane.b32.xlu0 %v1335, 32
  %v1338 = vpop.permute.xlu0 %1337
  %v1340 = vadd.f32 %v1330, %v1338
  %v1341 = vtanh.pop %v1340
  %1343 = vrot.lane.b32.xlu0 %v1341, 64
  %v1344 = vpop.permute.xlu0 %1343
  %v1346 = vmul.f32 %v1327, %v1344
  %1348 = vrot.lane.b32.xlu0 %v1346, 32
  %v1349 = vpop.permute.xlu0 %1348
  %1351 = vst.msk [vmem:[#allocation2 + $0x8] sm:$0xff] %vm336, %v1349
  %v1352 = vsel %vm336, %v1349, 0
  %1354 = vmatprep.subr.mxu0 0.0
  %1355 = vmatpush1.msra.mxu0 0.0
  %1356 = vmatprep.subr.mxu0 0.0
  %1357 = vmatpush1.msra.mxu0 0.0
  %1358 = vmatprep.subr.mxu0 0.0
  %1359 = vmatpush1.msra.mxu0 0.0
  %1360 = vmatprep.subr.mxu0 0.0
  %1361 = vmatpush1.msra.mxu0 0.0
  %1362 = vmatprep.subr.mxu0 0.0
  %1363 = vmatpush1.msra.mxu0 0.0
  %1364 = vmatprep.subr.mxu0 0.0
  %1365 = vmatpush1.msra.mxu0 0.0
  %1366 = vmatprep.subr.mxu0 0.0
  %1367 = vmatpush1.msra.mxu0 0.0
  %1368 = vmatprep.subr.mxu0 0.0
  %1369 = vmatpush1.msra.mxu0 0.0
  %1370 = vmatprep.subr.mxu0 0.0
  %1371 = vmatpush1.msra.mxu0 0.0
  %1372 = vmatprep.subr.mxu0 0.0
  %1373 = vmatpush1.msra.mxu0 0.0
  %1374 = vmatprep.subr.mxu0 0.0
  %1375 = vmatpush1.msra.mxu0 0.0
  %1376 = vmatprep.subr.mxu0 0.0
  %1377 = vmatpush1.msra.mxu0 0.0
  %1378 = vmatprep.subr.mxu0 0.0
  %1379 = vmatpush1.msra.mxu0 %v335
  %1380 = vmatprep.subr.mxu0 0.0
  %1381 = vmatpush1.msra.mxu0 %v334
  %1382 = vmatprep.subr.mxu0 0.0
  %1383 = vmatpush1.msra.mxu0 %v333
  %1384 = vmatprep.subr.mxu0 0.0
  %1385 = vmatpush1.msra.mxu0 %v332
  %1386 = vmatprep.subr.mxu0 0.0
  %1387 = vmatpush2.msra.mxu0 0.0
  %1388 = vmatprep.subr.mxu0 0.0
  %1389 = vmatpush2.msra.mxu0 0.0
  %1390 = vmatprep.subr.mxu0 0.0
  %1391 = vmatpush2.msra.mxu0 0.0
  %1392 = vmatprep.subr.mxu0 0.0
  %1393 = vmatpush2.msra.mxu0 0.0
  %1394 = vmatprep.subr.mxu0 0.0
  %1395 = vmatpush2.msra.mxu0 0.0
  %1396 = vmatprep.subr.mxu0 0.0
  %1397 = vmatpush2.msra.mxu0 0.0
  %1398 = vmatprep.subr.mxu0 0.0
  %1399 = vmatpush2.msra.mxu0 0.0
  %1400 = vmatprep.subr.mxu0 0.0
  %1401 = vmatpush2.msra.mxu0 0.0
  %1402 = vmatprep.subr.mxu0 0.0
  %1403 = vmatpush2.msra.mxu0 0.0
  %1404 = vmatprep.subr.mxu0 0.0
  %1405 = vmatpush2.msra.mxu0 0.0
  %1406 = vmatprep.subr.mxu0 0.0
  %1407 = vmatpush2.msra.mxu0 0.0
  %1408 = vmatprep.subr.mxu0 0.0
  %1409 = vmatpush2.msra.mxu0 0.0
  %1410 = vmatprep.subr.mxu0 0.0
  %1411 = vmatpush2.msra.mxu0 0.0
  %1412 = vmatprep.subr.mxu0 0.0
  %1413 = vmatpush2.msra.mxu0 0.0
  %1414 = vmatprep.subr.mxu0 0.0
  %1415 = vmatpush2.msra.mxu0 0.0
  %1416 = vmatprep.subr.mxu0 0.0
  %1417 = vmatpush2.msra.mxu0 0.0
  %1418 = vmatprep.mubr.f32.mxu0 0.0
  %1419 = vmatmul.mubr.f32.gmra.mxu0 %v1352
  %v1420 = vpop.f32.mrf.mxu0
  %v1421 = vadd.f32 0.0, %v1420
  %v1422 = vpop.f32.mrf.mxu0
  %1423 = vdwg.mxu0
  %v1424 = vadd.f32 %v300, %v1421
  %v1425 = vxor.u32 %v1424, 2147483648
  %v1426 = vmul.f32 %v1425, 1.442695
  %v1427 = vpow.pop %v1426
  %v1428 = vadd.f32 %v1427, 1.0
  %v1429 = vrcp.pop %v1428
  %v1430 = vmul.f32 1.0, %v1429
  %v1431 = vmul.f32 %v1430, 2.0
  %v1432 = vsub.f32 %v1431, 1.0
  %v1433 = vmul.f32 %v1430, %v1340
  %1435 = vrot.lane.b32.xlu0 %v1432, 64
  %v1436 = vpop.permute.xlu0 %1435
  %v1438 = vmul.f32 %v1430, %v1436
  %1440 = vrot.lane.b32.xlu0 %v1438, 32
  %v1441 = vpop.permute.xlu0 %1440
  %v1443 = vadd.f32 %v1433, %v1441
  %v1444 = vtanh.pop %v1443
  %1446 = vrot.lane.b32.xlu0 %v1444, 64
  %v1447 = vpop.permute.xlu0 %1446
  %v1449 = vmul.f32 %v1430, %v1447
  %1451 = vrot.lane.b32.xlu0 %v1449, 32
  %v1452 = vpop.permute.xlu0 %1451
  %1454 = vst.msk [vmem:[#allocation2 + $0x10] sm:$0xff] %vm336, %v1452
  %v1455 = vsel %vm336, %v1452, 0
  %1457 = vmatprep.subr.mxu0 0.0
  %1458 = vmatpush1.msra.mxu0 0.0
  %1459 = vmatprep.subr.mxu0 0.0
  %1460 = vmatpush1.msra.mxu0 0.0
  %1461 = vmatprep.subr.mxu0 0.0
  %1462 = vmatpush1.msra.mxu0 0.0
  %1463 = vmatprep.subr.mxu0 0.0
  %1464 = vmatpush1.msra.mxu0 0.0
  %1465 = vmatprep.subr.mxu0 0.0
  %1466 = vmatpush1.msra.mxu0 0.0
  %1467 = vmatprep.subr.mxu0 0.0
  %1468 = vmatpush1.msra.mxu0 0.0
  %1469 = vmatprep.subr.mxu0 0.0
  %1470 = vmatpush1.msra.mxu0 0.0
  %1471 = vmatprep.subr.mxu0 0.0
  %1472 = vmatpush1.msra.mxu0 0.0
  %1473 = vmatprep.subr.mxu0 0.0
  %1474 = vmatpush1.msra.mxu0 0.0
  %1475 = vmatprep.subr.mxu0 0.0
  %1476 = vmatpush1.msra.mxu0 0.0
  %1477 = vmatprep.subr.mxu0 0.0
  %1478 = vmatpush1.msra.mxu0 0.0
  %1479 = vmatprep.subr.mxu0 0.0
  %1480 = vmatpush1.msra.mxu0 0.0
  %1481 = vmatprep.subr.mxu0 0.0
  %1482 = vmatpush1.msra.mxu0 %v335
  %1483 = vmatprep.subr.mxu0 0.0
  %1484 = vmatpush1.msra.mxu0 %v334
  %1485 = vmatprep.subr.mxu0 0.0
  %1486 = vmatpush1.msra.mxu0 %v333
  %1487 = vmatprep.subr.mxu0 0.0
  %1488 = vmatpush1.msra.mxu0 %v332
  %1489 = vmatprep.subr.mxu0 0.0
  %1490 = vmatpush2.msra.mxu0 0.0
  %1491 = vmatprep.subr.mxu0 0.0
  %1492 = vmatpush2.msra.mxu0 0.0
  %1493 = vmatprep.subr.mxu0 0.0
  %1494 = vmatpush2.msra.mxu0 0.0
  %1495 = vmatprep.subr.mxu0 0.0
  %1496 = vmatpush2.msra.mxu0 0.0
  %1497 = vmatprep.subr.mxu0 0.0
  %1498 = vmatpush2.msra.mxu0 0.0
  %1499 = vmatprep.subr.mxu0 0.0
  %1500 = vmatpush2.msra.mxu0 0.0
  %1501 = vmatprep.subr.mxu0 0.0
  %1502 = vmatpush2.msra.mxu0 0.0
  %1503 = vmatprep.subr.mxu0 0.0
  %1504 = vmatpush2.msra.mxu0 0.0
  %1505 = vmatprep.subr.mxu0 0.0
  %1506 = vmatpush2.msra.mxu0 0.0
  %1507 = vmatprep.subr.mxu0 0.0
  %1508 = vmatpush2.msra.mxu0 0.0
  %1509 = vmatprep.subr.mxu0 0.0
  %1510 = vmatpush2.msra.mxu0 0.0
  %1511 = vmatprep.subr.mxu0 0.0
  %1512 = vmatpush2.msra.mxu0 0.0
  %1513 = vmatprep.subr.mxu0 0.0
  %1514 = vmatpush2.msra.mxu0 0.0
  %1515 = vmatprep.subr.mxu0 0.0
  %1516 = vmatpush2.msra.mxu0 0.0
  %1517 = vmatprep.subr.mxu0 0.0
  %1518 = vmatpush2.msra.mxu0 0.0
  %1519 = vmatprep.subr.mxu0 0.0
  %1520 = vmatpush2.msra.mxu0 0.0
  %1521 = vmatprep.mubr.f32.mxu0 0.0
  %1522 = vmatmul.mubr.f32.gmra.mxu0 %v1455
  %v1523 = vpop.f32.mrf.mxu0
  %v1524 = vadd.f32 0.0, %v1523
  %v1525 = vpop.f32.mrf.mxu0
  %1526 = vdwg.mxu0
  %v1527 = vadd.f32 %v305, %v1524
  %v1528 = vxor.u32 %v1527, 2147483648
  %v1529 = vmul.f32 %v1528, 1.442695
  %v1530 = vpow.pop %v1529
  %v1531 = vadd.f32 %v1530, 1.0
  %v1532 = vrcp.pop %v1531
  %v1533 = vmul.f32 1.0, %v1532
  %v1534 = vmul.f32 %v1533, 2.0
  %v1535 = vsub.f32 %v1534, 1.0
  %v1536 = vmul.f32 %v1533, %v1443
  %1538 = vrot.lane.b32.xlu0 %v1535, 64
  %v1539 = vpop.permute.xlu0 %1538
  %v1541 = vmul.f32 %v1533, %v1539
  %1543 = vrot.lane.b32.xlu0 %v1541, 32
  %v1544 = vpop.permute.xlu0 %1543
  %v1546 = vadd.f32 %v1536, %v1544
  %v1547 = vtanh.pop %v1546
  %1549 = vrot.lane.b32.xlu0 %v1547, 64
  %v1550 = vpop.permute.xlu0 %1549
  %v1552 = vmul.f32 %v1533, %v1550
  %1554 = vrot.lane.b32.xlu0 %v1552, 32
  %v1555 = vpop.permute.xlu0 %1554
  %1557 = vst.msk [vmem:[#allocation2 + $0x18] sm:$0xff] %vm336, %v1555
  %v1558 = vsel %vm336, %v1555, 0
  %1560 = vmatprep.subr.mxu0 0.0
  %1561 = vmatpush1.msra.mxu0 0.0
  %1562 = vmatprep.subr.mxu0 0.0
  %1563 = vmatpush1.msra.mxu0 0.0
  %1564 = vmatprep.subr.mxu0 0.0
  %1565 = vmatpush1.msra.mxu0 0.0
  %1566 = vmatprep.subr.mxu0 0.0
  %1567 = vmatpush1.msra.mxu0 0.0
  %1568 = vmatprep.subr.mxu0 0.0
  %1569 = vmatpush1.msra.mxu0 0.0
  %1570 = vmatprep.subr.mxu0 0.0
  %1571 = vmatpush1.msra.mxu0 0.0
  %1572 = vmatprep.subr.mxu0 0.0
  %1573 = vmatpush1.msra.mxu0 0.0
  %1574 = vmatprep.subr.mxu0 0.0
  %1575 = vmatpush1.msra.mxu0 0.0
  %1576 = vmatprep.subr.mxu0 0.0
  %1577 = vmatpush1.msra.mxu0 0.0
  %1578 = vmatprep.subr.mxu0 0.0
  %1579 = vmatpush1.msra.mxu0 0.0
  %1580 = vmatprep.subr.mxu0 0.0
  %1581 = vmatpush1.msra.mxu0 0.0
  %1582 = vmatprep.subr.mxu0 0.0
  %1583 = vmatpush1.msra.mxu0 0.0
  %1584 = vmatprep.subr.mxu0 0.0
  %1585 = vmatpush1.msra.mxu0 %v335
  %1586 = vmatprep.subr.mxu0 0.0
  %1587 = vmatpush1.msra.mxu0 %v334
  %1588 = vmatprep.subr.mxu0 0.0
  %1589 = vmatpush1.msra.mxu0 %v333
  %1590 = vmatprep.subr.mxu0 0.0
  %1591 = vmatpush1.msra.mxu0 %v332
  %1592 = vmatprep.subr.mxu0 0.0
  %1593 = vmatpush2.msra.mxu0 0.0
  %1594 = vmatprep.subr.mxu0 0.0
  %1595 = vmatpush2.msra.mxu0 0.0
  %1596 = vmatprep.subr.mxu0 0.0
  %1597 = vmatpush2.msra.mxu0 0.0
  %1598 = vmatprep.subr.mxu0 0.0
  %1599 = vmatpush2.msra.mxu0 0.0
  %1600 = vmatprep.subr.mxu0 0.0
  %1601 = vmatpush2.msra.mxu0 0.0
  %1602 = vmatprep.subr.mxu0 0.0
  %1603 = vmatpush2.msra.mxu0 0.0
  %1604 = vmatprep.subr.mxu0 0.0
  %1605 = vmatpush2.msra.mxu0 0.0
  %1606 = vmatprep.subr.mxu0 0.0
  %1607 = vmatpush2.msra.mxu0 0.0
  %1608 = vmatprep.subr.mxu0 0.0
  %1609 = vmatpush2.msra.mxu0 0.0
  %1610 = vmatprep.subr.mxu0 0.0
  %1611 = vmatpush2.msra.mxu0 0.0
  %1612 = vmatprep.subr.mxu0 0.0
  %1613 = vmatpush2.msra.mxu0 0.0
  %1614 = vmatprep.subr.mxu0 0.0
  %1615 = vmatpush2.msra.mxu0 0.0
  %1616 = vmatprep.subr.mxu0 0.0
  %1617 = vmatpush2.msra.mxu0 0.0
  %1618 = vmatprep.subr.mxu0 0.0
  %1619 = vmatpush2.msra.mxu0 0.0
  %1620 = vmatprep.subr.mxu0 0.0
  %1621 = vmatpush2.msra.mxu0 0.0
  %1622 = vmatprep.subr.mxu0 0.0
  %1623 = vmatpush2.msra.mxu0 0.0
  %1624 = vmatprep.mubr.f32.mxu0 0.0
  %1625 = vmatmul.mubr.f32.gmra.mxu0 %v1558
  %v1626 = vpop.f32.mrf.mxu0
  %v1627 = vadd.f32 0.0, %v1626
  %v1628 = vpop.f32.mrf.mxu0
  %1629 = vdwg.mxu0
  %v1630 = vadd.f32 %v310, %v1627
  %v1631 = vxor.u32 %v1630, 2147483648
  %v1632 = vmul.f32 %v1631, 1.442695
  %v1633 = vpow.pop %v1632
  %v1634 = vadd.f32 %v1633, 1.0
  %v1635 = vrcp.pop %v1634
  %v1636 = vmul.f32 1.0, %v1635
  %v1637 = vmul.f32 %v1636, 2.0
  %v1638 = vsub.f32 %v1637, 1.0
  %v1639 = vmul.f32 %v1636, %v1546
  %1641 = vrot.lane.b32.xlu0 %v1638, 64
  %v1642 = vpop.permute.xlu0 %1641
  %v1644 = vmul.f32 %v1636, %v1642
  %1646 = vrot.lane.b32.xlu0 %v1644, 32
  %v1647 = vpop.permute.xlu0 %1646
  %v1649 = vadd.f32 %v1639, %v1647
  %v1650 = vtanh.pop %v1649
  %1652 = vrot.lane.b32.xlu0 %v1650, 64
  %v1653 = vpop.permute.xlu0 %1652
  %v1655 = vmul.f32 %v1636, %v1653
  %1657 = vrot.lane.b32.xlu0 %v1655, 32
  %v1658 = vpop.permute.xlu0 %1657
  %1660 = vst.msk [vmem:[#allocation2 + $0x20] sm:$0xff] %vm336, %v1658
  %v1661 = vsel %vm336, %v1658, 0
  %1663 = vmatprep.subr.mxu0 0.0
  %1664 = vmatpush1.msra.mxu0 0.0
  %1665 = vmatprep.subr.mxu0 0.0
  %1666 = vmatpush1.msra.mxu0 0.0
  %1667 = vmatprep.subr.mxu0 0.0
  %1668 = vmatpush1.msra.mxu0 0.0
  %1669 = vmatprep.subr.mxu0 0.0
  %1670 = vmatpush1.msra.mxu0 0.0
  %1671 = vmatprep.subr.mxu0 0.0
  %1672 = vmatpush1.msra.mxu0 0.0
  %1673 = vmatprep.subr.mxu0 0.0
  %1674 = vmatpush1.msra.mxu0 0.0
  %1675 = vmatprep.subr.mxu0 0.0
  %1676 = vmatpush1.msra.mxu0 0.0
  %1677 = vmatprep.subr.mxu0 0.0
  %1678 = vmatpush1.msra.mxu0 0.0
  %1679 = vmatprep.subr.mxu0 0.0
  %1680 = vmatpush1.msra.mxu0 0.0
  %1681 = vmatprep.subr.mxu0 0.0
  %1682 = vmatpush1.msra.mxu0 0.0
  %1683 = vmatprep.subr.mxu0 0.0
  %1684 = vmatpush1.msra.mxu0 0.0
  %1685 = vmatprep.subr.mxu0 0.0
  %1686 = vmatpush1.msra.mxu0 0.0
  %1687 = vmatprep.subr.mxu0 0.0
  %1688 = vmatpush1.msra.mxu0 %v335
  %1689 = vmatprep.subr.mxu0 0.0
  %1690 = vmatpush1.msra.mxu0 %v334
  %1691 = vmatprep.subr.mxu0 0.0
  %1692 = vmatpush1.msra.mxu0 %v333
  %1693 = vmatprep.subr.mxu0 0.0
  %1694 = vmatpush1.msra.mxu0 %v332
  %1695 = vmatprep.subr.mxu0 0.0
  %1696 = vmatpush2.msra.mxu0 0.0
  %1697 = vmatprep.subr.mxu0 0.0
  %1698 = vmatpush2.msra.mxu0 0.0
  %1699 = vmatprep.subr.mxu0 0.0
  %1700 = vmatpush2.msra.mxu0 0.0
  %1701 = vmatprep.subr.mxu0 0.0
  %1702 = vmatpush2.msra.mxu0 0.0
  %1703 = vmatprep.subr.mxu0 0.0
  %1704 = vmatpush2.msra.mxu0 0.0
  %1705 = vmatprep.subr.mxu0 0.0
  %1706 = vmatpush2.msra.mxu0 0.0
  %1707 = vmatprep.subr.mxu0 0.0
  %1708 = vmatpush2.msra.mxu0 0.0
  %1709 = vmatprep.subr.mxu0 0.0
  %1710 = vmatpush2.msra.mxu0 0.0
  %1711 = vmatprep.subr.mxu0 0.0
  %1712 = vmatpush2.msra.mxu0 0.0
  %1713 = vmatprep.subr.mxu0 0.0
  %1714 = vmatpush2.msra.mxu0 0.0
  %1715 = vmatprep.subr.mxu0 0.0
  %1716 = vmatpush2.msra.mxu0 0.0
  %1717 = vmatprep.subr.mxu0 0.0
  %1718 = vmatpush2.msra.mxu0 0.0
  %1719 = vmatprep.subr.mxu0 0.0
  %1720 = vmatpush2.msra.mxu0 0.0
  %1721 = vmatprep.subr.mxu0 0.0
  %1722 = vmatpush2.msra.mxu0 0.0
  %1723 = vmatprep.subr.mxu0 0.0
  %1724 = vmatpush2.msra.mxu0 0.0
  %1725 = vmatprep.subr.mxu0 0.0
  %1726 = vmatpush2.msra.mxu0 0.0
  %1727 = vmatprep.mubr.f32.mxu0 0.0
  %1728 = vmatmul.mubr.f32.gmra.mxu0 %v1661
  %v1729 = vpop.f32.mrf.mxu0
  %v1730 = vadd.f32 0.0, %v1729
  %v1731 = vpop.f32.mrf.mxu0
  %1732 = vdwg.mxu0
  %v1733 = vadd.f32 %v315, %v1730
  %v1734 = vxor.u32 %v1733, 2147483648
  %v1735 = vmul.f32 %v1734, 1.442695
  %v1736 = vpow.pop %v1735
  %v1737 = vadd.f32 %v1736, 1.0
  %v1738 = vrcp.pop %v1737
  %v1739 = vmul.f32 1.0, %v1738
  %v1740 = vmul.f32 %v1739, 2.0
  %v1741 = vsub.f32 %v1740, 1.0
  %v1742 = vmul.f32 %v1739, %v1649
  %1744 = vrot.lane.b32.xlu0 %v1741, 64
  %v1745 = vpop.permute.xlu0 %1744
  %v1747 = vmul.f32 %v1739, %v1745
  %1749 = vrot.lane.b32.xlu0 %v1747, 32
  %v1750 = vpop.permute.xlu0 %1749
  %v1752 = vadd.f32 %v1742, %v1750
  %v1753 = vtanh.pop %v1752
  %1755 = vrot.lane.b32.xlu0 %v1753, 64
  %v1756 = vpop.permute.xlu0 %1755
  %v1758 = vmul.f32 %v1739, %v1756
  %1760 = vrot.lane.b32.xlu0 %v1758, 32
  %v1761 = vpop.permute.xlu0 %1760
  %1763 = vst.msk [vmem:[#allocation2 + $0x28] sm:$0xff] %vm336, %v1761
  %v1764 = vsel %vm336, %v1761, 0
  %1766 = vmatprep.subr.mxu0 0.0
  %1767 = vmatpush1.msra.mxu0 0.0
  %1768 = vmatprep.subr.mxu0 0.0
  %1769 = vmatpush1.msra.mxu0 0.0
  %1770 = vmatprep.subr.mxu0 0.0
  %1771 = vmatpush1.msra.mxu0 0.0
  %1772 = vmatprep.subr.mxu0 0.0
  %1773 = vmatpush1.msra.mxu0 0.0
  %1774 = vmatprep.subr.mxu0 0.0
  %1775 = vmatpush1.msra.mxu0 0.0
  %1776 = vmatprep.subr.mxu0 0.0
  %1777 = vmatpush1.msra.mxu0 0.0
  %1778 = vmatprep.subr.mxu0 0.0
  %1779 = vmatpush1.msra.mxu0 0.0
  %1780 = vmatprep.subr.mxu0 0.0
  %1781 = vmatpush1.msra.mxu0 0.0
  %1782 = vmatprep.subr.mxu0 0.0
  %1783 = vmatpush1.msra.mxu0 0.0
  %1784 = vmatprep.subr.mxu0 0.0
  %1785 = vmatpush1.msra.mxu0 0.0
  %1786 = vmatprep.subr.mxu0 0.0
  %1787 = vmatpush1.msra.mxu0 0.0
  %1788 = vmatprep.subr.mxu0 0.0
  %1789 = vmatpush1.msra.mxu0 0.0
  %1790 = vmatprep.subr.mxu0 0.0
  %1791 = vmatpush1.msra.mxu0 %v335
  %1792 = vmatprep.subr.mxu0 0.0
  %1793 = vmatpush1.msra.mxu0 %v334
  %1794 = vmatprep.subr.mxu0 0.0
  %1795 = vmatpush1.msra.mxu0 %v333
  %1796 = vmatprep.subr.mxu0 0.0
  %1797 = vmatpush1.msra.mxu0 %v332
  %1798 = vmatprep.subr.mxu0 0.0
  %1799 = vmatpush2.msra.mxu0 0.0
  %1800 = vmatprep.subr.mxu0 0.0
  %1801 = vmatpush2.msra.mxu0 0.0
  %1802 = vmatprep.subr.mxu0 0.0
  %1803 = vmatpush2.msra.mxu0 0.0
  %1804 = vmatprep.subr.mxu0 0.0
  %1805 = vmatpush2.msra.mxu0 0.0
  %1806 = vmatprep.subr.mxu0 0.0
  %1807 = vmatpush2.msra.mxu0 0.0
  %1808 = vmatprep.subr.mxu0 0.0
  %1809 = vmatpush2.msra.mxu0 0.0
  %1810 = vmatprep.subr.mxu0 0.0
  %1811 = vmatpush2.msra.mxu0 0.0
  %1812 = vmatprep.subr.mxu0 0.0
  %1813 = vmatpush2.msra.mxu0 0.0
  %1814 = vmatprep.subr.mxu0 0.0
  %1815 = vmatpush2.msra.mxu0 0.0
  %1816 = vmatprep.subr.mxu0 0.0
  %1817 = vmatpush2.msra.mxu0 0.0
  %1818 = vmatprep.subr.mxu0 0.0
  %1819 = vmatpush2.msra.mxu0 0.0
  %1820 = vmatprep.subr.mxu0 0.0
  %1821 = vmatpush2.msra.mxu0 0.0
  %1822 = vmatprep.subr.mxu0 0.0
  %1823 = vmatpush2.msra.mxu0 0.0
  %1824 = vmatprep.subr.mxu0 0.0
  %1825 = vmatpush2.msra.mxu0 0.0
  %1826 = vmatprep.subr.mxu0 0.0
  %1827 = vmatpush2.msra.mxu0 0.0
  %1828 = vmatprep.subr.mxu0 0.0
  %1829 = vmatpush2.msra.mxu0 0.0
  %1830 = vmatprep.mubr.f32.mxu0 0.0
  %1831 = vmatmul.mubr.f32.gmra.mxu0 %v1764
  %v1832 = vpop.f32.mrf.mxu0
  %v1833 = vadd.f32 0.0, %v1832
  %v1834 = vpop.f32.mrf.mxu0
  %1835 = vdwg.mxu0
  %v1836 = vadd.f32 %v320, %v1833
  %v1837 = vxor.u32 %v1836, 2147483648
  %v1838 = vmul.f32 %v1837, 1.442695
  %v1839 = vpow.pop %v1838
  %v1840 = vadd.f32 %v1839, 1.0
  %v1841 = vrcp.pop %v1840
  %v1842 = vmul.f32 1.0, %v1841
  %v1843 = vmul.f32 %v1842, 2.0
  %v1844 = vsub.f32 %v1843, 1.0
  %v1845 = vmul.f32 %v1842, %v1752
  %1847 = vrot.lane.b32.xlu0 %v1844, 64
  %v1848 = vpop.permute.xlu0 %1847
  %v1850 = vmul.f32 %v1842, %v1848
  %1852 = vrot.lane.b32.xlu0 %v1850, 32
  %v1853 = vpop.permute.xlu0 %1852
  %v1855 = vadd.f32 %v1845, %v1853
  %v1856 = vtanh.pop %v1855
  %1858 = vrot.lane.b32.xlu0 %v1856, 64
  %v1859 = vpop.permute.xlu0 %1858
  %v1861 = vmul.f32 %v1842, %v1859
  %1863 = vrot.lane.b32.xlu0 %v1861, 32
  %v1864 = vpop.permute.xlu0 %1863
  %1866 = vst.msk [vmem:[#allocation2 + $0x30] sm:$0xff] %vm336, %v1864
  %v1867 = vsel %vm336, %v1864, 0
  %1869 = vmatprep.subr.mxu0 0.0
  %1870 = vmatpush1.msra.mxu0 0.0
  %1871 = vmatprep.subr.mxu0 0.0
  %1872 = vmatpush1.msra.mxu0 0.0
  %1873 = vmatprep.subr.mxu0 0.0
  %1874 = vmatpush1.msra.mxu0 0.0
  %1875 = vmatprep.subr.mxu0 0.0
  %1876 = vmatpush1.msra.mxu0 0.0
  %1877 = vmatprep.subr.mxu0 0.0
  %1878 = vmatpush1.msra.mxu0 0.0
  %1879 = vmatprep.subr.mxu0 0.0
  %1880 = vmatpush1.msra.mxu0 0.0
  %1881 = vmatprep.subr.mxu0 0.0
  %1882 = vmatpush1.msra.mxu0 0.0
  %1883 = vmatprep.subr.mxu0 0.0
  %1884 = vmatpush1.msra.mxu0 0.0
  %1885 = vmatprep.subr.mxu0 0.0
  %1886 = vmatpush1.msra.mxu0 0.0
  %1887 = vmatprep.subr.mxu0 0.0
  %1888 = vmatpush1.msra.mxu0 0.0
  %1889 = vmatprep.subr.mxu0 0.0
  %1890 = vmatpush1.msra.mxu0 0.0
  %1891 = vmatprep.subr.mxu0 0.0
  %1892 = vmatpush1.msra.mxu0 0.0
  %1893 = vmatprep.subr.mxu0 0.0
  %1894 = vmatpush1.msra.mxu0 %v335
  %1895 = vmatprep.subr.mxu0 0.0
  %1896 = vmatpush1.msra.mxu0 %v334
  %1897 = vmatprep.subr.mxu0 0.0
  %1898 = vmatpush1.msra.mxu0 %v333
  %1899 = vmatprep.subr.mxu0 0.0
  %1900 = vmatpush1.msra.mxu0 %v332
  %1901 = vmatprep.subr.mxu0 0.0
  %1902 = vmatpush2.msra.mxu0 0.0
  %1903 = vmatprep.subr.mxu0 0.0
  %1904 = vmatpush2.msra.mxu0 0.0
  %1905 = vmatprep.subr.mxu0 0.0
  %1906 = vmatpush2.msra.mxu0 0.0
  %1907 = vmatprep.subr.mxu0 0.0
  %1908 = vmatpush2.msra.mxu0 0.0
  %1909 = vmatprep.subr.mxu0 0.0
  %1910 = vmatpush2.msra.mxu0 0.0
  %1911 = vmatprep.subr.mxu0 0.0
  %1912 = vmatpush2.msra.mxu0 0.0
  %1913 = vmatprep.subr.mxu0 0.0
  %1914 = vmatpush2.msra.mxu0 0.0
  %1915 = vmatprep.subr.mxu0 0.0
  %1916 = vmatpush2.msra.mxu0 0.0
  %1917 = vmatprep.subr.mxu0 0.0
  %1918 = vmatpush2.msra.mxu0 0.0
  %1919 = vmatprep.subr.mxu0 0.0
  %1920 = vmatpush2.msra.mxu0 0.0
  %1921 = vmatprep.subr.mxu0 0.0
  %1922 = vmatpush2.msra.mxu0 0.0
  %1923 = vmatprep.subr.mxu0 0.0
  %1924 = vmatpush2.msra.mxu0 0.0
  %1925 = vmatprep.subr.mxu0 0.0
  %1926 = vmatpush2.msra.mxu0 0.0
  %1927 = vmatprep.subr.mxu0 0.0
  %1928 = vmatpush2.msra.mxu0 0.0
  %1929 = vmatprep.subr.mxu0 0.0
  %1930 = vmatpush2.msra.mxu0 0.0
  %1931 = vmatprep.subr.mxu0 0.0
  %1932 = vmatpush2.msra.mxu0 0.0
  %1933 = vmatprep.mubr.f32.mxu0 0.0
  %1934 = vmatmul.mubr.f32.gmra.mxu0 %v1867
  %v1935 = vpop.f32.mrf.mxu0
  %v1936 = vadd.f32 0.0, %v1935
  %v1937 = vpop.f32.mrf.mxu0
  %1938 = vdwg.mxu0
  %v1939 = vadd.f32 %v325, %v1936
  %v1940 = vxor.u32 %v1939, 2147483648
  %v1941 = vmul.f32 %v1940, 1.442695
  %v1942 = vpow.pop %v1941
  %v1943 = vadd.f32 %v1942, 1.0
  %v1944 = vrcp.pop %v1943
  %v1945 = vmul.f32 1.0, %v1944
  %v1946 = vmul.f32 %v1945, 2.0
  %v1947 = vsub.f32 %v1946, 1.0
  %v1948 = vmul.f32 %v1945, %v1855
  %1950 = vrot.lane.b32.xlu0 %v1947, 64
  %v1951 = vpop.permute.xlu0 %1950
  %v1953 = vmul.f32 %v1945, %v1951
  %1955 = vrot.lane.b32.xlu0 %v1953, 32
  %v1956 = vpop.permute.xlu0 %1955
  %v1958 = vadd.f32 %v1948, %v1956
  %v1959 = vtanh.pop %v1958
  %1961 = vrot.lane.b32.xlu0 %v1959, 64
  %v1962 = vpop.permute.xlu0 %1961
  %v1964 = vmul.f32 %v1945, %v1962
  %1966 = vrot.lane.b32.xlu0 %v1964, 32
  %v1967 = vpop.permute.xlu0 %1966
  %1969 = vst.msk [vmem:[#allocation2 + $0x38] sm:$0xff] %vm336, %v1967
  %v1970 = vld [vmem:[#allocation2] sm:$0xff]
  %v1971 = vld [vmem:[#allocation2 + $0x8] sm:$0xff]
  %v1972 = vld [vmem:[#allocation2 + $0x10] sm:$0xff]
  %v1973 = vld [vmem:[#allocation2 + $0x18] sm:$0xff]
  %v1974 = vld [vmem:[#allocation2 + $0x20] sm:$0xff]
  %v1975 = vld [vmem:[#allocation2 + $0x28] sm:$0xff]
  %v1976 = vld [vmem:[#allocation2 + $0x30] sm:$0xff]
  %v1977 = vld [vmem:[#allocation2 + $0x38] sm:$0xff]
  %v1978 = vld [vmem:[%s8] sm:$0xff]
  %v1979 = vld [vmem:[%s8 + $0x8] sm:$0xff]
  %v1980 = vld [vmem:[%s8 + $0x10] sm:$0xff]
  %v1981 = vld [vmem:[%s8 + $0x18] sm:$0xff]
  %v1982 = vld [vmem:[%s9] sm:$0x1]
  %v1984 = vlaneseq
  %v1985 = vshrl.u32 %v1984, 7
  %v1986 = vsub.s32 0, %v1985
  %v1987 = vrot.slane %v1982, %v1986
  %v1990 = vsel %vm336, %v1970, 0
  %v1993 = vsel %vm336, %v1971, 0
  %v1996 = vsel %vm336, %v1972, 0
  %v1999 = vsel %vm336, %v1973, 0
  %v2002 = vsel %vm336, %v1974, 0
  %v2005 = vsel %vm336, %v1975, 0
  %v2008 = vsel %vm336, %v1976, 0
  %v2011 = vsel %vm336, %v1977, 0
  %2013 = vmatprep.subr.mxu0 0.0
  %2014 = vmatpush1.msra.mxu0 0.0
  %2015 = vmatprep.subr.mxu0 0.0
  %2016 = vmatpush1.msra.mxu0 0.0
  %2017 = vmatprep.subr.mxu0 0.0
  %2018 = vmatpush1.msra.mxu0 0.0
  %2019 = vmatprep.subr.mxu0 0.0
  %2020 = vmatpush1.msra.mxu0 0.0
  %2021 = vmatprep.subr.mxu0 0.0
  %2022 = vmatpush1.msra.mxu0 0.0
  %2023 = vmatprep.subr.mxu0 0.0
  %2024 = vmatpush1.msra.mxu0 0.0
  %2025 = vmatprep.subr.mxu0 0.0
  %2026 = vmatpush1.msra.mxu0 0.0
  %2027 = vmatprep.subr.mxu0 0.0
  %2028 = vmatpush1.msra.mxu0 0.0
  %2029 = vmatprep.subr.mxu0 0.0
  %2030 = vmatpush1.msra.mxu0 0.0
  %2031 = vmatprep.subr.mxu0 0.0
  %2032 = vmatpush1.msra.mxu0 0.0
  %2033 = vmatprep.subr.mxu0 0.0
  %2034 = vmatpush1.msra.mxu0 0.0
  %2035 = vmatprep.subr.mxu0 0.0
  %2036 = vmatpush1.msra.mxu0 0.0
  %2037 = vmatprep.subr.mxu0 0.0
  %2038 = vmatpush1.msra.mxu0 %v1981
  %2039 = vmatprep.subr.mxu0 0.0
  %2040 = vmatpush1.msra.mxu0 %v1980
  %2041 = vmatprep.subr.mxu0 0.0
  %2042 = vmatpush1.msra.mxu0 %v1979
  %2043 = vmatprep.subr.mxu0 0.0
  %2044 = vmatpush1.msra.mxu0 %v1978
  %2045 = vmatprep.subr.mxu0 0.0
  %2046 = vmatpush2.msra.mxu0 0.0
  %2047 = vmatprep.subr.mxu0 0.0
  %2048 = vmatpush2.msra.mxu0 0.0
  %2049 = vmatprep.subr.mxu0 0.0
  %2050 = vmatpush2.msra.mxu0 0.0
  %2051 = vmatprep.subr.mxu0 0.0
  %2052 = vmatpush2.msra.mxu0 0.0
  %2053 = vmatprep.subr.mxu0 0.0
  %2054 = vmatpush2.msra.mxu0 0.0
  %2055 = vmatprep.subr.mxu0 0.0
  %2056 = vmatpush2.msra.mxu0 0.0
  %2057 = vmatprep.subr.mxu0 0.0
  %2058 = vmatpush2.msra.mxu0 0.0
  %2059 = vmatprep.subr.mxu0 0.0
  %2060 = vmatpush2.msra.mxu0 0.0
  %2061 = vmatprep.subr.mxu0 0.0
  %2062 = vmatpush2.msra.mxu0 0.0
  %2063 = vmatprep.subr.mxu0 0.0
  %2064 = vmatpush2.msra.mxu0 0.0
  %2065 = vmatprep.subr.mxu0 0.0
  %2066 = vmatpush2.msra.mxu0 0.0
  %2067 = vmatprep.subr.mxu0 0.0
  %2068 = vmatpush2.msra.mxu0 0.0
  %2069 = vmatprep.subr.mxu0 0.0
  %2070 = vmatpush2.msra.mxu0 0.0
  %2071 = vmatprep.subr.mxu0 0.0
  %2072 = vmatpush2.msra.mxu0 0.0
  %2073 = vmatprep.subr.mxu0 0.0
  %2074 = vmatpush2.msra.mxu0 0.0
  %2075 = vmatprep.subr.mxu0 0.0
  %2076 = vmatpush2.msra.mxu0 0.0
  %2077 = vmatprep.mubr.f32.mxu0 0.0
  %2078 = vmatmul.mubr.f32.gmra.mxu0 %v1990
  %v2079 = vpop.f32.mrf.mxu0
  %v2080 = vadd.f32 %v1987, %v2079
  %v2081 = vpop.f32.mrf.mxu0
  %2082 = vmatprep.mubr.f32.mxu0 0.0
  %2083 = vmatmul.mubr.f32.gmra.mxu0 %v1993
  %v2084 = vpop.f32.mrf.mxu0
  %v2085 = vadd.f32 %v1987, %v2084
  %v2086 = vpop.f32.mrf.mxu0
  %2087 = vmatprep.mubr.f32.mxu0 0.0
  %2088 = vmatmul.mubr.f32.gmra.mxu0 %v1996
  %v2089 = vpop.f32.mrf.mxu0
  %v2090 = vadd.f32 %v1987, %v2089
  %v2091 = vpop.f32.mrf.mxu0
  %2092 = vmatprep.mubr.f32.mxu0 0.0
  %2093 = vmatmul.mubr.f32.gmra.mxu0 %v1999
  %v2094 = vpop.f32.mrf.mxu0
  %v2095 = vadd.f32 %v1987, %v2094
  %v2096 = vpop.f32.mrf.mxu0
  %2097 = vmatprep.mubr.f32.mxu0 0.0
  %2098 = vmatmul.mubr.f32.gmra.mxu0 %v2002
  %v2099 = vpop.f32.mrf.mxu0
  %v2100 = vadd.f32 %v1987, %v2099
  %v2101 = vpop.f32.mrf.mxu0
  %2102 = vmatprep.mubr.f32.mxu0 0.0
  %2103 = vmatmul.mubr.f32.gmra.mxu0 %v2005
  %v2104 = vpop.f32.mrf.mxu0
  %v2105 = vadd.f32 %v1987, %v2104
  %v2106 = vpop.f32.mrf.mxu0
  %2107 = vmatprep.mubr.f32.mxu0 0.0
  %2108 = vmatmul.mubr.f32.gmra.mxu0 %v2008
  %v2109 = vpop.f32.mrf.mxu0
  %v2110 = vadd.f32 %v1987, %v2109
  %v2111 = vpop.f32.mrf.mxu0
  %2112 = vmatprep.mubr.f32.mxu0 0.0
  %2113 = vmatmul.mubr.f32.gmra.mxu0 %v2011
  %v2114 = vpop.f32.mrf.mxu0
  %v2115 = vadd.f32 %v1987, %v2114
  %v2116 = vpop.f32.mrf.mxu0
  %2117 = vdwg.mxu0
  %2118 = vst [vmem:[%s10] sm:$0xff] %v2080
  %2119 = vst [vmem:[%s10 + $0x8] sm:$0xff] %v2085
  %2120 = vst [vmem:[%s10 + $0x10] sm:$0xff] %v2090
  %2121 = vst [vmem:[%s10 + $0x18] sm:$0xff] %v2095
  %2122 = vst [vmem:[%s10 + $0x20] sm:$0xff] %v2100
  %2123 = vst [vmem:[%s10 + $0x28] sm:$0xff] %v2105
  %2124 = vst [vmem:[%s10 + $0x30] sm:$0xff] %v2110
  %2125 = vst [vmem:[%s10 + $0x38] sm:$0xff] %v2115
  // Predicated region
  $region42: #{seq2seq_forward.1} parent=0 // pred_check
    _
  $region43: #{seq2seq_forward.1} parent=0 // pred_check_branch
    %2127 = sbr.rel (0) target = $region45
  $region44: #{seq2seq_forward.1} parent=0 // pred_region
    _
  $region45: #{seq2seq_forward.1} parent=0 // pred_fallthru
    _
  // Predicated region
  $region46: #{seq2seq_forward.1} parent=0 // pred_check
    _
  $region47: #{seq2seq_forward.1} parent=0 // pred_check_branch
    %2129 = sbr.rel (0) target = $region49
  $region48: #{seq2seq_forward.1} parent=0 // pred_region
    _
  $region49: #{seq2seq_forward.1} parent=0 // pred_fallthru
    _

</llo_original>
